<compile_context>
chip_gen: v5e
topology: v5e:2x2
jax: 0.10.0
libtpu: 0.0.40
codegen_flags: <defaults>
</compile_context>

<pallas_src>
import math
import functools

import jax
import jax.numpy as jnp
from jax.experimental import pallas as pl
from jax.experimental.pallas import tpu as pltpu

SCALED_SILU = 1.0 / 0.6  # ScaledSiLU scale factor


def _ssilu(x):
    return x * jax.nn.sigmoid(x) * SCALED_SILU


def _bdot(a, w):
    """MXU matmul: bf16 operands, f32 accumulation."""
    return jnp.dot(a.astype(jnp.bfloat16), w.astype(jnp.bfloat16),
                   preferred_element_type=jnp.float32)


# ---------------------------------------------------------------------------
# The fused PaiNN kernel
# ---------------------------------------------------------------------------
def painn_kernel(
    # node / edge data + dense gather/scatter operators (VMEM)
    feat_ref, rbf_ref, rijb_ref, osrc_ref, odst_ref,
    # embedding linear
    emb_w_ref, emb_b_ref,
    # message layers (stacked over L)
    m_lng_ref, m_lnb_ref, m_w1_ref, m_b1_ref, m_w2_ref, m_b2_ref,
    m_wr_ref, m_br_ref,
    # update layers (stacked over L, Wu1 pre-split into x / vec2n halves)
    u_wv_ref, u_wu1a_ref, u_wu1b_ref, u_bu1_ref, u_wu2_ref, u_bu2_ref,
    # gated equivariant block 1 (H -> H//2, Wu1 pre-split)
    g1_wv1_ref, g1_wv2_ref, g1_wu1a_ref, g1_wu1b_ref, g1_bu1_ref,
    g1_wu2_ref, g1_bu2_ref,
    # outputs (lane-dense block-1 results)
    x1_ref, vec1_ref,
    *, NP, EP, H, L):
    inv_sqrt_3 = 1.0 / math.sqrt(3.0)
    inv_sqrt_h = 1.0 / math.sqrt(H)
    inv_sqrt_2 = 1.0 / math.sqrt(2.0)
    H2 = H // 2

    # loop-invariant edge data / operators
    rbf = rbf_ref[...]                   # [EP, R]
    rijb = rijb_ref[...]                 # [3*EP, H] direction-major broadcast r_ij
    osrc = osrc_ref[...]                 # [EP, NP] bf16 one-hot gather operator
    odst = odst_ref[...]                 # [NP, EP] bf16 one-hot scatter-add operator

    # ---- initial embedding: x = cat([atom_emb, t_emb]) @ W + b ----
    x = _bdot(feat_ref[...], emb_w_ref[...]) + emb_b_ref[...]     # [NP, H]
    vec = jnp.zeros((3 * NP, H), jnp.float32)                     # direction-major

    for l in range(L):
        # ===================== PaiNNMessage =====================
        mu = jnp.mean(x, axis=-1, keepdims=True)
        xc = x - mu
        var = jnp.mean(xc * xc, axis=-1, keepdims=True)
        xn = xc * jax.lax.rsqrt(var + 1e-5) * m_lng_ref[l] + m_lnb_ref[l]

        h1 = _ssilu(_bdot(xn, m_w1_ref[l]) + m_b1_ref[l])
        xh = _bdot(h1, m_w2_ref[l]) + m_b2_ref[l]                 # [NP, 3H] fused
        rbfh = _bdot(rbf, m_wr_ref[l]) + m_br_ref[l]              # [EP, 3H] fused

        # --- gather xh_j / vec_j with one-hot MXU matmuls (no per-edge loop) ---
        ej = jnp.dot(osrc, xh.astype(jnp.bfloat16),
                     preferred_element_type=jnp.float32)          # [EP, 3H]
        vj = [jnp.dot(osrc, vec[d * NP:(d + 1) * NP].astype(jnp.bfloat16),
                      preferred_element_type=jnp.float32)         # [EP, H] each
              for d in range(3)]

        # slice-wise products (no full [EP,3H] prod temp)
        msg = ej[:, 0:H] * rbfh[:, 0:H]                           # scalar message
        xh2 = ej[:, H:2 * H] * rbfh[:, H:2 * H] * inv_sqrt_3
        xh3 = ej[:, 2 * H:3 * H] * rbfh[:, 2 * H:3 * H]

        # --- scatter-add via one-hot MXU matmul ---
        dx = jnp.dot(odst, msg.astype(jnp.bfloat16),
                     preferred_element_type=jnp.float32)          # [NP, H]
        x = (x + dx) * inv_sqrt_2                                 # x = (x+dx)/sqrt(2)

        new_vec = []
        for d in range(3):
            dvec_e = (vj[d] * xh2 + xh3 * rijb[d * EP:(d + 1) * EP]) * inv_sqrt_h
            dvec_n = jnp.dot(odst, dvec_e.astype(jnp.bfloat16),
                             preferred_element_type=jnp.float32)
            new_vec.append(vec[d * NP:(d + 1) * NP] + dvec_n)
        vec = jnp.concatenate(new_vec, axis=0)                    # [3NP, H]

        # ===================== PaiNNUpdate =====================
        v12 = _bdot(vec, u_wv_ref[l])                             # [3NP, 2H] fused
        vec1 = v12[:, 0:H]
        vec2 = v12[:, H:2 * H]
        v1 = [vec1[d * NP:(d + 1) * NP] for d in range(3)]
        v2 = [vec2[d * NP:(d + 1) * NP] for d in range(3)]
        vec_dot = (v1[0] * v2[0] + v1[1] * v2[1] + v1[2] * v2[2]) * inv_sqrt_h
        vec2n = jnp.sqrt(v2[0] * v2[0] + v2[1] * v2[1] + v2[2] * v2[2] + 1e-8)

        # split-K matmuls instead of concat([x, vec2n]) @ Wu1
        h = _ssilu(_bdot(x, u_wu1a_ref[l]) + _bdot(vec2n, u_wu1b_ref[l])
                   + u_bu1_ref[l])
        xv = _bdot(h, u_wu2_ref[l]) + u_bu2_ref[l]                # [NP, 3H] fused
        xv1 = xv[:, 0:H]
        xv2 = xv[:, H:2 * H]
        xv3 = xv[:, 2 * H:3 * H]

        dx = (xv1 + xv2 * vec_dot) * inv_sqrt_2
        x = (x + dx) * inv_sqrt_2
        # per-direction gated vector update (no [3N,H] gate broadcast temp)
        vec = jnp.concatenate(
            [vec[d * NP:(d + 1) * NP] + v1[d] * xv3 for d in range(3)], axis=0)

    # ========= PaiNNOutput: gated equivariant block 1 (H -> H//2) =========
    gv1 = _bdot(vec, g1_wv1_ref[...])                             # [3NP, H]
    gv2 = _bdot(vec, g1_wv2_ref[...])                             # [3NP, H2]
    g1a, g1b, g1c = gv1[0:NP], gv1[NP:2 * NP], gv1[2 * NP:3 * NP]
    vec1n = jnp.sqrt(g1a * g1a + g1b * g1b + g1c * g1c)           # torch.norm (no eps)
    hg = _ssilu(_bdot(x, g1_wu1a_ref[...]) + _bdot(vec1n, g1_wu1b_ref[...])
                + g1_bu1_ref[...])
    u = _bdot(hg, g1_wu2_ref[...]) + g1_bu2_ref[...]              # [NP, 2*H2] fused
    xo = _ssilu(u[:, 0:H2])
    gate = u[:, H2:2 * H2]

    x1_ref[...] = xo                                              # [NP, H2]
    for d in range(3):
        vec1_ref[pl.ds(d * NP, NP), :] = gv2[d * NP:(d + 1) * NP] * gate


# ---------------------------------------------------------------------------
# Parameter init (xavier-uniform weights -> bf16 for MXU, f32 biases / LN)
# ---------------------------------------------------------------------------
def _xavier(key, fan_in, fan_out):
    bound = math.sqrt(6.0 / (fan_in + fan_out))
    return jax.random.uniform(key, (fan_in, fan_out), jnp.float32, -bound, bound)


def init_params(key, H, R, L, num_elements):
    keys = iter(jax.random.split(key, 64))
    nk = lambda: next(keys)
    bf = lambda w: w.astype(jnp.bfloat16)
    H2 = H // 2
    p = {}
    p["atom_emb"] = jax.random.uniform(
        nk(), (num_elements, H), jnp.float32, -math.sqrt(3.0), math.sqrt(3.0))
    # TODO(synk): GaussianFourierProjection is not defined in the reference
    # snippet; using standard sin/cos Fourier features of t.
    p["t_W"] = jax.random.normal(nk(), (H // 2,), jnp.float32) * float(R)

    p["emb_W"] = bf(_xavier(nk(), 2 * H, H))
    p["emb_b"] = jnp.zeros((1, H), jnp.float32)

    # TODO(synk): RadialBasis internals are not given; gaussian RBF on d/cutoff
    # with a polynomial envelope (exponent 5) per the module config.
    p["rbf_offsets"] = jnp.linspace(0.0, 1.0, R).astype(jnp.float32)
    p["rbf_coeff"] = jnp.float32(-0.5 / (1.0 / (R - 1)) ** 2)

    names = ["m_lng", "m_lnb", "m_W1", "m_b1", "m_W2", "m_b2", "m_Wr", "m_br",
             "u_Wv", "u_Wu1a", "u_Wu1b", "u_bu1", "u_Wu2", "u_bu2"]
    stacks = {k: [] for k in names}
    for _ in range(L):
        stacks["m_lng"].append(jnp.ones((1, H), jnp.float32))
        stacks["m_lnb"].append(jnp.zeros((1, H), jnp.float32))
        stacks["m_W1"].append(_xavier(nk(), H, H))
        stacks["m_b1"].append(jnp.zeros((1, H), jnp.float32))
        stacks["m_W2"].append(_xavier(nk(), H, 3 * H))
        stacks["m_b2"].append(jnp.zeros((1, 3 * H), jnp.float32))
        stacks["m_Wr"].append(_xavier(nk(), R, 3 * H))
        stacks["m_br"].append(jnp.zeros((1, 3 * H), jnp.float32))
        stacks["u_Wv"].append(_xavier(nk(), H, 2 * H))
        wu1 = _xavier(nk(), 2 * H, H)               # xavier on the fused [2H,H]
        stacks["u_Wu1a"].append(wu1[:H])            # half applied to x
        stacks["u_Wu1b"].append(wu1[H:])            # half applied to |vec2|
        stacks["u_bu1"].append(jnp.zeros((1, H), jnp.float32))
        stacks["u_Wu2"].append(_xavier(nk(), H, 3 * H))
        stacks["u_bu2"].append(jnp.zeros((1, 3 * H), jnp.float32))
    bf_keys = {"m_W1", "m_W2", "m_Wr", "u_Wv", "u_Wu1a", "u_Wu1b", "u_Wu2"}
    for k in names:
        s = jnp.stack(stacks[k])
        p[k] = bf(s) if k in bf_keys else s

    # gated equivariant block 1 (in-kernel, H -> H//2), update weight pre-split
    g1_wu1 = _xavier(nk(), 2 * H, H)
    p["g1"] = dict(
        wv1=bf(_xavier(nk(), H, H)),
        wv2=bf(_xavier(nk(), H, H2)),
        wu1a=bf(g1_wu1[:H]), wu1b=bf(g1_wu1[H:]),
        bu1=jnp.zeros((1, H), jnp.float32),
        wu2=bf(_xavier(nk(), H, 2 * H2)),
        bu2=jnp.zeros((1, 2 * H2), jnp.float32))
    # gated equivariant block 2 (H//2 -> 1): lane-sparse head, runs in XLA (f32)
    p["g2"] = dict(
        wv1=_xavier(nk(), H2, H2),
        wv2=_xavier(nk(), H2, 1),
        wu1=_xavier(nk(), 2 * H2, H2),
        bu1=jnp.zeros((H2,), jnp.float32),
        wu2=_xavier(nk(), H2, 2),
        bu2=jnp.zeros((2,), jnp.float32))
    return p


# ---------------------------------------------------------------------------
# Forward
# ---------------------------------------------------------------------------
def painn_forward(params, atomic_numbers, t, pos, edge_index, num_layers, hidden,
                  cutoff=10.0):
    N = int(atomic_numbers.shape[0])
    E = int(edge_index.shape[1])
    H = int(hidden)
    H2 = H // 2
    L = int(num_layers)
    R = int(params["rbf_offsets"].shape[0])
    NP = ((N + 7) // 8) * 8      # sublane-aligned padded node count
    EP = ((E + 7) // 8) * 8      # sublane-aligned padded edge count

    # --- glue: atom embedding lookup + Fourier time features ---
    atom_emb = params["atom_emb"][atomic_numbers]                     # [N, H]
    tp = t[:, None] * params["t_W"][None, :] * (2.0 * jnp.pi)
    t_emb = jnp.concatenate([jnp.sin(tp), jnp.cos(tp)], axis=-1)      # [N, H]
    feat = jnp.concatenate([atom_emb, t_emb], axis=-1).astype(jnp.float32)
    feat = jnp.pad(feat, ((0, NP - N), (0, 0)))

    # --- glue: edge geometry + radial basis (elementwise over E) ---
    src = edge_index[0].astype(jnp.int32)
    dst = edge_index[1].astype(jnp.int32)
    diff = (pos[src] - pos[dst]).astype(jnp.float32)                  # r_ij [E, 3]
    dist = jnp.sqrt(jnp.sum(diff * diff, axis=-1))
    ds = dist / cutoff
    pexp = 5
    env = jnp.where(
        ds < 1.0,
        1.0
        + (-(pexp + 1) * (pexp + 2) / 2.0) * ds ** pexp
        + (pexp * (pexp + 2)) * ds ** (pexp + 1)
        + (-(pexp * (pexp + 1) / 2.0)) * ds ** (pexp + 2),
        0.0,
    )
    edge_rbf = (env[:, None] * jnp.exp(
        params["rbf_coeff"]
        * (ds[:, None] - params["rbf_offsets"][None, :]) ** 2)).astype(jnp.float32)
    edge_rbf = jnp.pad(edge_rbf, ((0, EP - E), (0, 0)))

    # direction-major, lane-dense broadcast of r_ij (hoists the per-layer
    # column-slice + broadcast out of the kernel).
    diff_p = jnp.pad(diff, ((0, EP - E), (0, 0)))
    rijb = jnp.broadcast_to(diff_p.T.reshape(3 * EP, 1), (3 * EP, H))
    rijb = rijb.astype(jnp.float32)

    # dense one-hot gather / scatter-add operators (bf16 -> MXU). Padded edges
    # use index -1 so their rows/cols are all-zero and contribute nothing.
    # TODO(synk): at production E,N these become dst-sorted edge-tile-local
    # operators on a grid (segment accumulation) instead of dense [E,N].
    src_p = jnp.pad(src, (0, EP - E), constant_values=-1)
    dst_p = jnp.pad(dst, (0, EP - E), constant_values=-1)
    node_ids = jnp.arange(NP, dtype=jnp.int32)
    onehot_src = (src_p[:, None] == node_ids[None, :]).astype(jnp.bfloat16)  # [EP,NP]
    onehot_dst = (node_ids[:, None] == dst_p[None, :]).astype(jnp.bfloat16)  # [NP,EP]

    g1 = params["g1"]
    inputs = (
        feat, edge_rbf, rijb, onehot_src, onehot_dst,
        params["emb_W"], params["emb_b"],
        params["m_lng"], params["m_lnb"], params["m_W1"], params["m_b1"],
        params["m_W2"], params["m_b2"], params["m_Wr"], params["m_br"],
        params["u_Wv"], params["u_Wu1a"], params["u_Wu1b"], params["u_bu1"],
        params["u_Wu2"], params["u_bu2"],
        g1["wv1"], g1["wv2"], g1["wu1a"], g1["wu1b"], g1["bu1"],
        g1["wu2"], g1["bu2"],
    )
    out_shapes = (jax.ShapeDtypeStruct((NP, H2), jnp.float32),
                  jax.ShapeDtypeStruct((3 * NP, H2), jnp.float32))

    # cost / memory hints for the scheduler and the scoped-VMEM limit
    in_bytes = sum(int(a.size) * int(a.dtype.itemsize) for a in inputs)
    out_bytes = sum(4 * math.prod(s.shape) for s in out_shapes)
    flops = L * 2 * (4 * NP * H * H + 3 * EP * R * H + 10 * EP * NP * H
                     + 13 * NP * H * H)
    flops += 2 * (3 * NP * H * (H + H2) + 3 * NP * H * H)
    transcend = L * (3 * NP * H) + NP * H + EP * R
    cost = pl.CostEstimate(flops=int(flops), transcendentals=int(transcend),
                           bytes_accessed=int(in_bytes + out_bytes))
    temp_bytes = 4 * (2 * EP * 3 * H + 5 * EP * H + 4 * NP * 3 * H + 4 * NP * H)
    vmem_limit = int(min(100 * 1024 * 1024,
                         max(16 * 1024 * 1024, 2 * (in_bytes + out_bytes + temp_bytes))))

    vmem = pl.BlockSpec(memory_space=pltpu.MemorySpace.VMEM)
    kernel = functools.partial(painn_kernel, NP=NP, EP=EP, H=H, L=L)
    # TODO(synk): add a parallel node-tile grid (dimension_semantics /
    # core_map) + per-layer weight streaming for v7x production sizes.
    x1p, vec1p = pl.pallas_call(
        kernel,
        out_shape=out_shapes,
        in_specs=[vmem] * len(inputs),
        out_specs=(vmem, vmem),
        compiler_params=pltpu.CompilerParams(vmem_limit_bytes=vmem_limit),
        cost_estimate=cost,
    )(*inputs)

    # ---- gated equivariant block 2 (H//2 -> 1) in plain XLA: keeps the
    # kernel outputs lane-dense instead of a [3N,1] masked-store head. ----
    x1 = x1p[:N]                                        # [N, H2]
    vec1 = vec1p.reshape(3, NP, H2)[:, :N, :]           # [3, N, H2]
    g2 = params["g2"]
    v1 = jnp.einsum("dnh,hk->dnk", vec1, g2["wv1"])     # [3, N, H2]
    v2 = jnp.einsum("dnh,hk->dnk", vec1, g2["wv2"])     # [3, N, 1]
    vec1n = jnp.sqrt(jnp.sum(v1 * v1, axis=0))          # torch.norm over directions
    h = _ssilu(jnp.concatenate([x1, vec1n], axis=-1) @ g2["wu1"] + g2["bu1"])
    u = h @ g2["wu2"] + g2["bu2"]                       # [N, 2]
    gate = u[:, 1]                                      # [N]
    dpos = jnp.transpose(v2[:, :, 0] * gate[None, :])   # [N, 3]
    return dpos.astype(jnp.float32)


# ---------------------------------------------------------------------------
if __name__ == "__main__":
    key = jax.random.PRNGKey(0)
    N, E, H, R = 8, 16, 32, 16          # nodes, edges, hidden, num_rbf
    NUM_LAYERS, NUM_ELEMENTS = 2, 10

    kp, ka, kt, kpos, ke = jax.random.split(key, 5)
    params = init_params(kp, H, R, NUM_LAYERS, NUM_ELEMENTS)

    atomic_numbers = jax.random.randint(ka, (N,), 0, NUM_ELEMENTS)
    t = jax.random.uniform(kt, (N,), jnp.float32)
    pos = jax.random.normal(kpos, (N, 3), jnp.float32)
    edge_index = jax.random.randint(ke, (2, E), 0, N)

    dpos = painn_forward(params, atomic_numbers, t, pos, edge_index, NUM_LAYERS, H)
    dpos = jax.block_until_ready(dpos)
    assert dpos.shape == (N, 3) and dpos.dtype == jnp.float32
    print("KERNEL_OK")
</pallas_src>

<mosaic_0001>
module attributes {stable_mosaic.version = 11 : i64} {
  func.func @painn_kernel(%arg0: memref<8x64xf32, #tpu.memory_space<vmem>>, %arg1: memref<16x16xf32, #tpu.memory_space<vmem>>, %arg2: memref<48x32xf32, #tpu.memory_space<vmem>>, %arg3: memref<16x8xbf16, #tpu.memory_space<vmem>>, %arg4: memref<8x16xbf16, #tpu.memory_space<vmem>>, %arg5: memref<64x32xbf16, #tpu.memory_space<vmem>>, %arg6: memref<1x32xf32, #tpu.memory_space<vmem>>, %arg7: memref<2x1x32xf32, #tpu.memory_space<vmem>>, %arg8: memref<2x1x32xf32, #tpu.memory_space<vmem>>, %arg9: memref<2x32x32xbf16, #tpu.memory_space<vmem>>, %arg10: memref<2x1x32xf32, #tpu.memory_space<vmem>>, %arg11: memref<2x32x96xbf16, #tpu.memory_space<vmem>>, %arg12: memref<2x1x96xf32, #tpu.memory_space<vmem>>, %arg13: memref<2x16x96xbf16, #tpu.memory_space<vmem>>, %arg14: memref<2x1x96xf32, #tpu.memory_space<vmem>>, %arg15: memref<2x32x64xbf16, #tpu.memory_space<vmem>>, %arg16: memref<2x32x32xbf16, #tpu.memory_space<vmem>>, %arg17: memref<2x32x32xbf16, #tpu.memory_space<vmem>>, %arg18: memref<2x1x32xf32, #tpu.memory_space<vmem>>, %arg19: memref<2x32x96xbf16, #tpu.memory_space<vmem>>, %arg20: memref<2x1x96xf32, #tpu.memory_space<vmem>>, %arg21: memref<32x32xbf16, #tpu.memory_space<vmem>>, %arg22: memref<32x16xbf16, #tpu.memory_space<vmem>>, %arg23: memref<32x32xbf16, #tpu.memory_space<vmem>>, %arg24: memref<32x32xbf16, #tpu.memory_space<vmem>>, %arg25: memref<1x32xf32, #tpu.memory_space<vmem>>, %arg26: memref<32x32xbf16, #tpu.memory_space<vmem>>, %arg27: memref<1x32xf32, #tpu.memory_space<vmem>>, %arg28: memref<8x16xf32, #tpu.memory_space<vmem>>, %arg29: memref<24x16xf32, #tpu.memory_space<vmem>>) attributes {dimension_semantics = [], scalar_prefetch = 0 : i64, scratch_operands = 0 : i64, tpu.core_type = #tpu.core_type<tc>} {
    %c0 = arith.constant 0 : index
    %c0_0 = arith.constant 0 : index
    %0 = vector.load %arg1[%c0, %c0_0] : memref<16x16xf32, #tpu.memory_space<vmem>>, vector<16x16xf32>
    %c0_1 = arith.constant 0 : index
    %c0_2 = arith.constant 0 : index
    %1 = vector.load %arg2[%c0_1, %c0_2] : memref<48x32xf32, #tpu.memory_space<vmem>>, vector<48x32xf32>
    %c0_3 = arith.constant 0 : index
    %c0_4 = arith.constant 0 : index
    %2 = vector.load %arg3[%c0_3, %c0_4] : memref<16x8xbf16, #tpu.memory_space<vmem>>, vector<16x8xbf16>
    %c0_5 = arith.constant 0 : index
    %c0_6 = arith.constant 0 : index
    %3 = vector.load %arg4[%c0_5, %c0_6] : memref<8x16xbf16, #tpu.memory_space<vmem>>, vector<8x16xbf16>
    %c0_7 = arith.constant 0 : index
    %c0_8 = arith.constant 0 : index
    %4 = vector.load %arg0[%c0_7, %c0_8] : memref<8x64xf32, #tpu.memory_space<vmem>>, vector<8x64xf32>
    %c0_9 = arith.constant 0 : index
    %c0_10 = arith.constant 0 : index
    %5 = vector.load %arg5[%c0_9, %c0_10] : memref<64x32xbf16, #tpu.memory_space<vmem>>, vector<64x32xbf16>
    %6 = arith.truncf %4 : vector<8x64xf32> to vector<8x64xbf16>
    %cst = arith.constant dense<0.000000e+00> : vector<8x32xf32>
    %7 = tpu.matmul %6, %5, %cst {dimension_numbers = #tpu.dot_dimension_numbers<[1], [0], [0], [1], [0, 0, 1, 1], [], []>} : vector<8x64xbf16>, vector<64x32xbf16>, vector<8x32xf32> -> vector<8x32xf32>
    %c0_11 = arith.constant 0 : index
    %c0_12 = arith.constant 0 : index
    %8 = vector.load %arg6[%c0_11, %c0_12] : memref<1x32xf32, #tpu.memory_space<vmem>>, vector<1x32xf32>
    %9 = vector.broadcast %8 : vector<1x32xf32> to vector<8x32xf32>
    %10 = arith.addf %7, %9 : vector<8x32xf32>
    %cst_13 = arith.constant 0.000000e+00 : f32
    %11 = vector.broadcast %cst_13 : f32 to vector<24x32xf32>
    %cst_14 = arith.constant dense<0.000000e+00> : vector<8xf32>
    %12 = vector.multi_reduction <add>, %10, %cst_14 [1] : vector<8x32xf32> to vector<8xf32>
    %13 = vector.shape_cast %12 : vector<8xf32> to vector<8x1xf32>
    %cst_15 = arith.constant 3.200000e+01 : f32
    %14 = vector.broadcast %cst_15 : f32 to vector<8x1xf32>
    %15 = arith.divf %13, %14 : vector<8x1xf32>
    %16 = vector.broadcast %15 : vector<8x1xf32> to vector<8x32xf32>
    %17 = arith.subf %10, %16 : vector<8x32xf32>
    %18 = arith.mulf %17, %17 : vector<8x32xf32>
    %cst_16 = arith.constant dense<0.000000e+00> : vector<8xf32>
    %19 = vector.multi_reduction <add>, %18, %cst_16 [1] : vector<8x32xf32> to vector<8xf32>
    %20 = vector.shape_cast %19 : vector<8xf32> to vector<8x1xf32>
    %cst_17 = arith.constant 3.200000e+01 : f32
    %21 = vector.broadcast %cst_17 : f32 to vector<8x1xf32>
    %22 = arith.divf %20, %21 : vector<8x1xf32>
    %cst_18 = arith.constant 9.99999974E-6 : f32
    %23 = vector.broadcast %cst_18 : f32 to vector<8x1xf32>
    %24 = arith.addf %22, %23 : vector<8x1xf32>
    %25 = math.rsqrt %24 : vector<8x1xf32>
    %26 = vector.broadcast %25 : vector<8x1xf32> to vector<8x32xf32>
    %27 = arith.mulf %17, %26 : vector<8x32xf32>
    %c0_19 = arith.constant 0 : index
    %c0_20 = arith.constant 0 : index
    %c0_21 = arith.constant 0 : index
    %28 = vector.load %arg7[%c0_19, %c0_20, %c0_21] : memref<2x1x32xf32, #tpu.memory_space<vmem>>, vector<1x1x32xf32>
    %29 = vector.shape_cast %28 : vector<1x1x32xf32> to vector<1x32xf32>
    %30 = vector.broadcast %29 : vector<1x32xf32> to vector<8x32xf32>
    %31 = arith.mulf %27, %30 : vector<8x32xf32>
    %c0_22 = arith.constant 0 : index
    %c0_23 = arith.constant 0 : index
    %c0_24 = arith.constant 0 : index
    %32 = vector.load %arg8[%c0_22, %c0_23, %c0_24] : memref<2x1x32xf32, #tpu.memory_space<vmem>>, vector<1x1x32xf32>
    %33 = vector.shape_cast %32 : vector<1x1x32xf32> to vector<1x32xf32>
    %34 = vector.broadcast %33 : vector<1x32xf32> to vector<8x32xf32>
    %35 = arith.addf %31, %34 : vector<8x32xf32>
    %c0_25 = arith.constant 0 : index
    %c0_26 = arith.constant 0 : index
    %c0_27 = arith.constant 0 : index
    %36 = vector.load %arg9[%c0_25, %c0_26, %c0_27] : memref<2x32x32xbf16, #tpu.memory_space<vmem>>, vector<1x32x32xbf16>
    %37 = vector.shape_cast %36 : vector<1x32x32xbf16> to vector<32x32xbf16>
    %38 = arith.truncf %35 : vector<8x32xf32> to vector<8x32xbf16>
    %cst_28 = arith.constant dense<0.000000e+00> : vector<8x32xf32>
    %39 = tpu.matmul %38, %37, %cst_28 {dimension_numbers = #tpu.dot_dimension_numbers<[1], [0], [0], [1], [0, 0, 1, 1], [], []>} : vector<8x32xbf16>, vector<32x32xbf16>, vector<8x32xf32> -> vector<8x32xf32>
    %c0_29 = arith.constant 0 : index
    %c0_30 = arith.constant 0 : index
    %c0_31 = arith.constant 0 : index
    %40 = vector.load %arg10[%c0_29, %c0_30, %c0_31] : memref<2x1x32xf32, #tpu.memory_space<vmem>>, vector<1x1x32xf32>
    %41 = vector.shape_cast %40 : vector<1x1x32xf32> to vector<1x32xf32>
    %42 = vector.broadcast %41 : vector<1x32xf32> to vector<8x32xf32>
    %43 = arith.addf %39, %42 : vector<8x32xf32>
    %44 = arith.negf %43 : vector<8x32xf32>
    %45 = math.exp %44 : vector<8x32xf32>
    %cst_32 = arith.constant 1.000000e+00 : f32
    %46 = vector.broadcast %cst_32 : f32 to vector<8x32xf32>
    %47 = arith.addf %46, %45 : vector<8x32xf32>
    %48 = arith.divf %46, %47 : vector<8x32xf32>
    %49 = arith.mulf %43, %48 : vector<8x32xf32>
    %cst_33 = arith.constant 1.66666663 : f32
    %50 = vector.broadcast %cst_33 : f32 to vector<8x32xf32>
    %51 = arith.mulf %49, %50 : vector<8x32xf32>
    %c0_34 = arith.constant 0 : index
    %c0_35 = arith.constant 0 : index
    %c0_36 = arith.constant 0 : index
    %52 = vector.load %arg11[%c0_34, %c0_35, %c0_36] : memref<2x32x96xbf16, #tpu.memory_space<vmem>>, vector<1x32x96xbf16>
    %53 = vector.shape_cast %52 : vector<1x32x96xbf16> to vector<32x96xbf16>
    %54 = arith.truncf %51 : vector<8x32xf32> to vector<8x32xbf16>
    %cst_37 = arith.constant dense<0.000000e+00> : vector<8x96xf32>
    %55 = tpu.matmul %54, %53, %cst_37 {dimension_numbers = #tpu.dot_dimension_numbers<[1], [0], [0], [1], [0, 0, 1, 1], [], []>} : vector<8x32xbf16>, vector<32x96xbf16>, vector<8x96xf32> -> vector<8x96xf32>
    %c0_38 = arith.constant 0 : index
    %c0_39 = arith.constant 0 : index
    %c0_40 = arith.constant 0 : index
    %56 = vector.load %arg12[%c0_38, %c0_39, %c0_40] : memref<2x1x96xf32, #tpu.memory_space<vmem>>, vector<1x1x96xf32>
    %57 = vector.shape_cast %56 : vector<1x1x96xf32> to vector<1x96xf32>
    %58 = vector.broadcast %57 : vector<1x96xf32> to vector<8x96xf32>
    %59 = arith.addf %55, %58 : vector<8x96xf32>
    %c0_41 = arith.constant 0 : index
    %c0_42 = arith.constant 0 : index
    %c0_43 = arith.constant 0 : index
    %60 = vector.load %arg13[%c0_41, %c0_42, %c0_43] : memref<2x16x96xbf16, #tpu.memory_space<vmem>>, vector<1x16x96xbf16>
    %61 = vector.shape_cast %60 : vector<1x16x96xbf16> to vector<16x96xbf16>
    %62 = arith.truncf %0 : vector<16x16xf32> to vector<16x16xbf16>
    %cst_44 = arith.constant dense<0.000000e+00> : vector<16x96xf32>
    %63 = tpu.matmul %62, %61, %cst_44 {dimension_numbers = #tpu.dot_dimension_numbers<[1], [0], [0], [1], [0, 0, 1, 1], [], []>} : vector<16x16xbf16>, vector<16x96xbf16>, vector<16x96xf32> -> vector<16x96xf32>
    %c0_45 = arith.constant 0 : index
    %c0_46 = arith.constant 0 : index
    %c0_47 = arith.constant 0 : index
    %64 = vector.load %arg14[%c0_45, %c0_46, %c0_47] : memref<2x1x96xf32, #tpu.memory_space<vmem>>, vector<1x1x96xf32>
    %65 = vector.shape_cast %64 : vector<1x1x96xf32> to vector<1x96xf32>
    %66 = vector.broadcast %65 : vector<1x96xf32> to vector<16x96xf32>
    %67 = arith.addf %63, %66 : vector<16x96xf32>
    %68 = arith.truncf %59 : vector<8x96xf32> to vector<8x96xbf16>
    %cst_48 = arith.constant dense<0.000000e+00> : vector<16x96xf32>
    %69 = tpu.matmul %2, %68, %cst_48 {dimension_numbers = #tpu.dot_dimension_numbers<[1], [0], [0], [1], [0, 0, 1, 1], [], []>} : vector<16x8xbf16>, vector<8x96xbf16>, vector<16x96xf32> -> vector<16x96xf32>
    %70 = vector.extract_strided_slice %11 {offsets = [0, 0], sizes = [8, 32], strides = [1, 1]} : vector<24x32xf32> to vector<8x32xf32>
    %71 = arith.truncf %70 : vector<8x32xf32> to vector<8x32xbf16>
    %cst_49 = arith.constant dense<0.000000e+00> : vector<16x32xf32>
    %72 = tpu.matmul %2, %71, %cst_49 {dimension_numbers = #tpu.dot_dimension_numbers<[1], [0], [0], [1], [0, 0, 1, 1], [], []>} : vector<16x8xbf16>, vector<8x32xbf16>, vector<16x32xf32> -> vector<16x32xf32>
    %73 = vector.extract_strided_slice %11 {offsets = [8, 0], sizes = [8, 32], strides = [1, 1]} : vector<24x32xf32> to vector<8x32xf32>
    %74 = arith.truncf %73 : vector<8x32xf32> to vector<8x32xbf16>
    %cst_50 = arith.constant dense<0.000000e+00> : vector<16x32xf32>
    %75 = tpu.matmul %2, %74, %cst_50 {dimension_numbers = #tpu.dot_dimension_numbers<[1], [0], [0], [1], [0, 0, 1, 1], [], []>} : vector<16x8xbf16>, vector<8x32xbf16>, vector<16x32xf32> -> vector<16x32xf32>
    %76 = vector.extract_strided_slice %11 {offsets = [16, 0], sizes = [8, 32], strides = [1, 1]} : vector<24x32xf32> to vector<8x32xf32>
    %77 = arith.truncf %76 : vector<8x32xf32> to vector<8x32xbf16>
    %cst_51 = arith.constant dense<0.000000e+00> : vector<16x32xf32>
    %78 = tpu.matmul %2, %77, %cst_51 {dimension_numbers = #tpu.dot_dimension_numbers<[1], [0], [0], [1], [0, 0, 1, 1], [], []>} : vector<16x8xbf16>, vector<8x32xbf16>, vector<16x32xf32> -> vector<16x32xf32>
    %79 = vector.extract_strided_slice %69 {offsets = [0, 0], sizes = [16, 32], strides = [1, 1]} : vector<16x96xf32> to vector<16x32xf32>
    %80 = vector.extract_strided_slice %67 {offsets = [0, 0], sizes = [16, 32], strides = [1, 1]} : vector<16x96xf32> to vector<16x32xf32>
    %81 = arith.mulf %79, %80 : vector<16x32xf32>
    %82 = vector.extract_strided_slice %69 {offsets = [0, 32], sizes = [16, 32], strides = [1, 1]} : vector<16x96xf32> to vector<16x32xf32>
    %83 = vector.extract_strided_slice %67 {offsets = [0, 32], sizes = [16, 32], strides = [1, 1]} : vector<16x96xf32> to vector<16x32xf32>
    %84 = arith.mulf %82, %83 : vector<16x32xf32>
    %cst_52 = arith.constant 0.577350259 : f32
    %85 = vector.broadcast %cst_52 : f32 to vector<16x32xf32>
    %86 = arith.mulf %84, %85 : vector<16x32xf32>
    %87 = vector.extract_strided_slice %69 {offsets = [0, 64], sizes = [16, 32], strides = [1, 1]} : vector<16x96xf32> to vector<16x32xf32>
    %88 = vector.extract_strided_slice %67 {offsets = [0, 64], sizes = [16, 32], strides = [1, 1]} : vector<16x96xf32> to vector<16x32xf32>
    %89 = arith.mulf %87, %88 : vector<16x32xf32>
    %90 = arith.truncf %81 : vector<16x32xf32> to vector<16x32xbf16>
    %cst_53 = arith.constant dense<0.000000e+00> : vector<8x32xf32>
    %91 = tpu.matmul %3, %90, %cst_53 {dimension_numbers = #tpu.dot_dimension_numbers<[1], [0], [0], [1], [0, 0, 1, 1], [], []>} : vector<8x16xbf16>, vector<16x32xbf16>, vector<8x32xf32> -> vector<8x32xf32>
    %92 = arith.addf %10, %91 : vector<8x32xf32>
    %cst_54 = arith.constant 0.707106769 : f32
    %93 = vector.broadcast %cst_54 : f32 to vector<8x32xf32>
    %94 = arith.mulf %92, %93 : vector<8x32xf32>
    %95 = arith.mulf %72, %86 : vector<16x32xf32>
    %96 = vector.extract_strided_slice %1 {offsets = [0, 0], sizes = [16, 32], strides = [1, 1]} : vector<48x32xf32> to vector<16x32xf32>
    %97 = arith.mulf %89, %96 : vector<16x32xf32>
    %98 = arith.addf %95, %97 : vector<16x32xf32>
    %cst_55 = arith.constant 0.176776692 : f32
    %99 = vector.broadcast %cst_55 : f32 to vector<16x32xf32>
    %100 = arith.mulf %98, %99 : vector<16x32xf32>
    %101 = arith.truncf %100 : vector<16x32xf32> to vector<16x32xbf16>
    %cst_56 = arith.constant dense<0.000000e+00> : vector<8x32xf32>
    %102 = tpu.matmul %3, %101, %cst_56 {dimension_numbers = #tpu.dot_dimension_numbers<[1], [0], [0], [1], [0, 0, 1, 1], [], []>} : vector<8x16xbf16>, vector<16x32xbf16>, vector<8x32xf32> -> vector<8x32xf32>
    %103 = vector.extract_strided_slice %11 {offsets = [0, 0], sizes = [8, 32], strides = [1, 1]} : vector<24x32xf32> to vector<8x32xf32>
    %104 = arith.addf %103, %102 : vector<8x32xf32>
    %105 = arith.mulf %75, %86 : vector<16x32xf32>
    %106 = vector.extract_strided_slice %1 {offsets = [16, 0], sizes = [16, 32], strides = [1, 1]} : vector<48x32xf32> to vector<16x32xf32>
    %107 = arith.mulf %89, %106 : vector<16x32xf32>
    %108 = arith.addf %105, %107 : vector<16x32xf32>
    %cst_57 = arith.constant 0.176776692 : f32
    %109 = vector.broadcast %cst_57 : f32 to vector<16x32xf32>
    %110 = arith.mulf %108, %109 : vector<16x32xf32>
    %111 = arith.truncf %110 : vector<16x32xf32> to vector<16x32xbf16>
    %cst_58 = arith.constant dense<0.000000e+00> : vector<8x32xf32>
    %112 = tpu.matmul %3, %111, %cst_58 {dimension_numbers = #tpu.dot_dimension_numbers<[1], [0], [0], [1], [0, 0, 1, 1], [], []>} : vector<8x16xbf16>, vector<16x32xbf16>, vector<8x32xf32> -> vector<8x32xf32>
    %113 = vector.extract_strided_slice %11 {offsets = [8, 0], sizes = [8, 32], strides = [1, 1]} : vector<24x32xf32> to vector<8x32xf32>
    %114 = arith.addf %113, %112 : vector<8x32xf32>
    %115 = arith.mulf %78, %86 : vector<16x32xf32>
    %116 = vector.extract_strided_slice %1 {offsets = [32, 0], sizes = [16, 32], strides = [1, 1]} : vector<48x32xf32> to vector<16x32xf32>
    %117 = arith.mulf %89, %116 : vector<16x32xf32>
    %118 = arith.addf %115, %117 : vector<16x32xf32>
    %cst_59 = arith.constant 0.176776692 : f32
    %119 = vector.broadcast %cst_59 : f32 to vector<16x32xf32>
    %120 = arith.mulf %118, %119 : vector<16x32xf32>
    %121 = arith.truncf %120 : vector<16x32xf32> to vector<16x32xbf16>
    %cst_60 = arith.constant dense<0.000000e+00> : vector<8x32xf32>
    %122 = tpu.matmul %3, %121, %cst_60 {dimension_numbers = #tpu.dot_dimension_numbers<[1], [0], [0], [1], [0, 0, 1, 1], [], []>} : vector<8x16xbf16>, vector<16x32xbf16>, vector<8x32xf32> -> vector<8x32xf32>
    %123 = vector.extract_strided_slice %11 {offsets = [16, 0], sizes = [8, 32], strides = [1, 1]} : vector<24x32xf32> to vector<8x32xf32>
    %124 = arith.addf %123, %122 : vector<8x32xf32>
    %125 = tpu.concatenate %104, %114, %124 in 0 : vector<8x32xf32>, vector<8x32xf32>, vector<8x32xf32> -> vector<24x32xf32>
    %c0_61 = arith.constant 0 : index
    %c0_62 = arith.constant 0 : index
    %c0_63 = arith.constant 0 : index
    %126 = vector.load %arg15[%c0_61, %c0_62, %c0_63] : memref<2x32x64xbf16, #tpu.memory_space<vmem>>, vector<1x32x64xbf16>
    %127 = vector.shape_cast %126 : vector<1x32x64xbf16> to vector<32x64xbf16>
    %128 = arith.truncf %125 : vector<24x32xf32> to vector<24x32xbf16>
    %cst_64 = arith.constant dense<0.000000e+00> : vector<24x64xf32>
    %129 = tpu.matmul %128, %127, %cst_64 {dimension_numbers = #tpu.dot_dimension_numbers<[1], [0], [0], [1], [0, 0, 1, 1], [], []>} : vector<24x32xbf16>, vector<32x64xbf16>, vector<24x64xf32> -> vector<24x64xf32>
    %130 = vector.extract_strided_slice %129 {offsets = [0, 0], sizes = [24, 32], strides = [1, 1]} : vector<24x64xf32> to vector<24x32xf32>
    %131 = vector.extract_strided_slice %129 {offsets = [0, 32], sizes = [24, 32], strides = [1, 1]} : vector<24x64xf32> to vector<24x32xf32>
    %132 = vector.extract_strided_slice %130 {offsets = [0, 0], sizes = [8, 32], strides = [1, 1]} : vector<24x32xf32> to vector<8x32xf32>
    %133 = vector.extract_strided_slice %130 {offsets = [8, 0], sizes = [8, 32], strides = [1, 1]} : vector<24x32xf32> to vector<8x32xf32>
    %134 = vector.extract_strided_slice %130 {offsets = [16, 0], sizes = [8, 32], strides = [1, 1]} : vector<24x32xf32> to vector<8x32xf32>
    %135 = vector.extract_strided_slice %131 {offsets = [0, 0], sizes = [8, 32], strides = [1, 1]} : vector<24x32xf32> to vector<8x32xf32>
    %136 = vector.extract_strided_slice %131 {offsets = [8, 0], sizes = [8, 32], strides = [1, 1]} : vector<24x32xf32> to vector<8x32xf32>
    %137 = vector.extract_strided_slice %131 {offsets = [16, 0], sizes = [8, 32], strides = [1, 1]} : vector<24x32xf32> to vector<8x32xf32>
    %138 = arith.mulf %132, %135 : vector<8x32xf32>
    %139 = arith.mulf %133, %136 : vector<8x32xf32>
    %140 = arith.addf %138, %139 : vector<8x32xf32>
    %141 = arith.mulf %134, %137 : vector<8x32xf32>
    %142 = arith.addf %140, %141 : vector<8x32xf32>
    %cst_65 = arith.constant 0.176776692 : f32
    %143 = vector.broadcast %cst_65 : f32 to vector<8x32xf32>
    %144 = arith.mulf %142, %143 : vector<8x32xf32>
    %145 = arith.mulf %135, %135 : vector<8x32xf32>
    %146 = arith.mulf %136, %136 : vector<8x32xf32>
    %147 = arith.addf %145, %146 : vector<8x32xf32>
    %148 = arith.mulf %137, %137 : vector<8x32xf32>
    %149 = arith.addf %147, %148 : vector<8x32xf32>
    %cst_66 = arith.constant 9.99999993E-9 : f32
    %150 = vector.broadcast %cst_66 : f32 to vector<8x32xf32>
    %151 = arith.addf %149, %150 : vector<8x32xf32>
    %152 = math.sqrt %151 : vector<8x32xf32>
    %c0_67 = arith.constant 0 : index
    %c0_68 = arith.constant 0 : index
    %c0_69 = arith.constant 0 : index
    %153 = vector.load %arg16[%c0_67, %c0_68, %c0_69] : memref<2x32x32xbf16, #tpu.memory_space<vmem>>, vector<1x32x32xbf16>
    %154 = vector.shape_cast %153 : vector<1x32x32xbf16> to vector<32x32xbf16>
    %155 = arith.truncf %94 : vector<8x32xf32> to vector<8x32xbf16>
    %cst_70 = arith.constant dense<0.000000e+00> : vector<8x32xf32>
    %156 = tpu.matmul %155, %154, %cst_70 {dimension_numbers = #tpu.dot_dimension_numbers<[1], [0], [0], [1], [0, 0, 1, 1], [], []>} : vector<8x32xbf16>, vector<32x32xbf16>, vector<8x32xf32> -> vector<8x32xf32>
    %c0_71 = arith.constant 0 : index
    %c0_72 = arith.constant 0 : index
    %c0_73 = arith.constant 0 : index
    %157 = vector.load %arg17[%c0_71, %c0_72, %c0_73] : memref<2x32x32xbf16, #tpu.memory_space<vmem>>, vector<1x32x32xbf16>
    %158 = vector.shape_cast %157 : vector<1x32x32xbf16> to vector<32x32xbf16>
    %159 = arith.truncf %152 : vector<8x32xf32> to vector<8x32xbf16>
    %cst_74 = arith.constant dense<0.000000e+00> : vector<8x32xf32>
    %160 = tpu.matmul %159, %158, %cst_74 {dimension_numbers = #tpu.dot_dimension_numbers<[1], [0], [0], [1], [0, 0, 1, 1], [], []>} : vector<8x32xbf16>, vector<32x32xbf16>, vector<8x32xf32> -> vector<8x32xf32>
    %161 = arith.addf %156, %160 : vector<8x32xf32>
    %c0_75 = arith.constant 0 : index
    %c0_76 = arith.constant 0 : index
    %c0_77 = arith.constant 0 : index
    %162 = vector.load %arg18[%c0_75, %c0_76, %c0_77] : memref<2x1x32xf32, #tpu.memory_space<vmem>>, vector<1x1x32xf32>
    %163 = vector.shape_cast %162 : vector<1x1x32xf32> to vector<1x32xf32>
    %164 = vector.broadcast %163 : vector<1x32xf32> to vector<8x32xf32>
    %165 = arith.addf %161, %164 : vector<8x32xf32>
    %166 = arith.negf %165 : vector<8x32xf32>
    %167 = math.exp %166 : vector<8x32xf32>
    %cst_78 = arith.constant 1.000000e+00 : f32
    %168 = vector.broadcast %cst_78 : f32 to vector<8x32xf32>
    %169 = arith.addf %168, %167 : vector<8x32xf32>
    %170 = arith.divf %168, %169 : vector<8x32xf32>
    %171 = arith.mulf %165, %170 : vector<8x32xf32>
    %cst_79 = arith.constant 1.66666663 : f32
    %172 = vector.broadcast %cst_79 : f32 to vector<8x32xf32>
    %173 = arith.mulf %171, %172 : vector<8x32xf32>
    %c0_80 = arith.constant 0 : index
    %c0_81 = arith.constant 0 : index
    %c0_82 = arith.constant 0 : index
    %174 = vector.load %arg19[%c0_80, %c0_81, %c0_82] : memref<2x32x96xbf16, #tpu.memory_space<vmem>>, vector<1x32x96xbf16>
    %175 = vector.shape_cast %174 : vector<1x32x96xbf16> to vector<32x96xbf16>
    %176 = arith.truncf %173 : vector<8x32xf32> to vector<8x32xbf16>
    %cst_83 = arith.constant dense<0.000000e+00> : vector<8x96xf32>
    %177 = tpu.matmul %176, %175, %cst_83 {dimension_numbers = #tpu.dot_dimension_numbers<[1], [0], [0], [1], [0, 0, 1, 1], [], []>} : vector<8x32xbf16>, vector<32x96xbf16>, vector<8x96xf32> -> vector<8x96xf32>
    %c0_84 = arith.constant 0 : index
    %c0_85 = arith.constant 0 : index
    %c0_86 = arith.constant 0 : index
    %178 = vector.load %arg20[%c0_84, %c0_85, %c0_86] : memref<2x1x96xf32, #tpu.memory_space<vmem>>, vector<1x1x96xf32>
    %179 = vector.shape_cast %178 : vector<1x1x96xf32> to vector<1x96xf32>
    %180 = vector.broadcast %179 : vector<1x96xf32> to vector<8x96xf32>
    %181 = arith.addf %177, %180 : vector<8x96xf32>
    %182 = vector.extract_strided_slice %181 {offsets = [0, 0], sizes = [8, 32], strides = [1, 1]} : vector<8x96xf32> to vector<8x32xf32>
    %183 = vector.extract_strided_slice %181 {offsets = [0, 32], sizes = [8, 32], strides = [1, 1]} : vector<8x96xf32> to vector<8x32xf32>
    %184 = vector.extract_strided_slice %181 {offsets = [0, 64], sizes = [8, 32], strides = [1, 1]} : vector<8x96xf32> to vector<8x32xf32>
    %185 = arith.mulf %183, %144 : vector<8x32xf32>
    %186 = arith.addf %182, %185 : vector<8x32xf32>
    %cst_87 = arith.constant 0.707106769 : f32
    %187 = vector.broadcast %cst_87 : f32 to vector<8x32xf32>
    %188 = arith.mulf %186, %187 : vector<8x32xf32>
    %189 = arith.addf %94, %188 : vector<8x32xf32>
    %cst_88 = arith.constant 0.707106769 : f32
    %190 = vector.broadcast %cst_88 : f32 to vector<8x32xf32>
    %191 = arith.mulf %189, %190 : vector<8x32xf32>
    %192 = vector.extract_strided_slice %125 {offsets = [0, 0], sizes = [8, 32], strides = [1, 1]} : vector<24x32xf32> to vector<8x32xf32>
    %193 = arith.mulf %132, %184 : vector<8x32xf32>
    %194 = arith.addf %192, %193 : vector<8x32xf32>
    %195 = vector.extract_strided_slice %125 {offsets = [8, 0], sizes = [8, 32], strides = [1, 1]} : vector<24x32xf32> to vector<8x32xf32>
    %196 = arith.mulf %133, %184 : vector<8x32xf32>
    %197 = arith.addf %195, %196 : vector<8x32xf32>
    %198 = vector.extract_strided_slice %125 {offsets = [16, 0], sizes = [8, 32], strides = [1, 1]} : vector<24x32xf32> to vector<8x32xf32>
    %199 = arith.mulf %134, %184 : vector<8x32xf32>
    %200 = arith.addf %198, %199 : vector<8x32xf32>
    %201 = tpu.concatenate %194, %197, %200 in 0 : vector<8x32xf32>, vector<8x32xf32>, vector<8x32xf32> -> vector<24x32xf32>
    %cst_89 = arith.constant dense<0.000000e+00> : vector<8xf32>
    %202 = vector.multi_reduction <add>, %191, %cst_89 [1] : vector<8x32xf32> to vector<8xf32>
    %203 = vector.shape_cast %202 : vector<8xf32> to vector<8x1xf32>
    %cst_90 = arith.constant 3.200000e+01 : f32
    %204 = vector.broadcast %cst_90 : f32 to vector<8x1xf32>
    %205 = arith.divf %203, %204 : vector<8x1xf32>
    %206 = vector.broadcast %205 : vector<8x1xf32> to vector<8x32xf32>
    %207 = arith.subf %191, %206 : vector<8x32xf32>
    %208 = arith.mulf %207, %207 : vector<8x32xf32>
    %cst_91 = arith.constant dense<0.000000e+00> : vector<8xf32>
    %209 = vector.multi_reduction <add>, %208, %cst_91 [1] : vector<8x32xf32> to vector<8xf32>
    %210 = vector.shape_cast %209 : vector<8xf32> to vector<8x1xf32>
    %cst_92 = arith.constant 3.200000e+01 : f32
    %211 = vector.broadcast %cst_92 : f32 to vector<8x1xf32>
    %212 = arith.divf %210, %211 : vector<8x1xf32>
    %cst_93 = arith.constant 9.99999974E-6 : f32
    %213 = vector.broadcast %cst_93 : f32 to vector<8x1xf32>
    %214 = arith.addf %212, %213 : vector<8x1xf32>
    %215 = math.rsqrt %214 : vector<8x1xf32>
    %216 = vector.broadcast %215 : vector<8x1xf32> to vector<8x32xf32>
    %217 = arith.mulf %207, %216 : vector<8x32xf32>
    %c1 = arith.constant 1 : index
    %c0_94 = arith.constant 0 : index
    %c0_95 = arith.constant 0 : index
    %218 = vector.load %arg7[%c1, %c0_94, %c0_95] : memref<2x1x32xf32, #tpu.memory_space<vmem>>, vector<1x1x32xf32>
    %219 = vector.shape_cast %218 : vector<1x1x32xf32> to vector<1x32xf32>
    %220 = vector.broadcast %219 : vector<1x32xf32> to vector<8x32xf32>
    %221 = arith.mulf %217, %220 : vector<8x32xf32>
    %c1_96 = arith.constant 1 : index
    %c0_97 = arith.constant 0 : index
    %c0_98 = arith.constant 0 : index
    %222 = vector.load %arg8[%c1_96, %c0_97, %c0_98] : memref<2x1x32xf32, #tpu.memory_space<vmem>>, vector<1x1x32xf32>
    %223 = vector.shape_cast %222 : vector<1x1x32xf32> to vector<1x32xf32>
    %224 = vector.broadcast %223 : vector<1x32xf32> to vector<8x32xf32>
    %225 = arith.addf %221, %224 : vector<8x32xf32>
    %c1_99 = arith.constant 1 : index
    %c0_100 = arith.constant 0 : index
    %c0_101 = arith.constant 0 : index
    %226 = vector.load %arg9[%c1_99, %c0_100, %c0_101] : memref<2x32x32xbf16, #tpu.memory_space<vmem>>, vector<1x32x32xbf16>
    %227 = vector.shape_cast %226 : vector<1x32x32xbf16> to vector<32x32xbf16>
    %228 = arith.truncf %225 : vector<8x32xf32> to vector<8x32xbf16>
    %cst_102 = arith.constant dense<0.000000e+00> : vector<8x32xf32>
    %229 = tpu.matmul %228, %227, %cst_102 {dimension_numbers = #tpu.dot_dimension_numbers<[1], [0], [0], [1], [0, 0, 1, 1], [], []>} : vector<8x32xbf16>, vector<32x32xbf16>, vector<8x32xf32> -> vector<8x32xf32>
    %c1_103 = arith.constant 1 : index
    %c0_104 = arith.constant 0 : index
    %c0_105 = arith.constant 0 : index
    %230 = vector.load %arg10[%c1_103, %c0_104, %c0_105] : memref<2x1x32xf32, #tpu.memory_space<vmem>>, vector<1x1x32xf32>
    %231 = vector.shape_cast %230 : vector<1x1x32xf32> to vector<1x32xf32>
    %232 = vector.broadcast %231 : vector<1x32xf32> to vector<8x32xf32>
    %233 = arith.addf %229, %232 : vector<8x32xf32>
    %234 = arith.negf %233 : vector<8x32xf32>
    %235 = math.exp %234 : vector<8x32xf32>
    %cst_106 = arith.constant 1.000000e+00 : f32
    %236 = vector.broadcast %cst_106 : f32 to vector<8x32xf32>
    %237 = arith.addf %236, %235 : vector<8x32xf32>
    %238 = arith.divf %236, %237 : vector<8x32xf32>
    %239 = arith.mulf %233, %238 : vector<8x32xf32>
    %cst_107 = arith.constant 1.66666663 : f32
    %240 = vector.broadcast %cst_107 : f32 to vector<8x32xf32>
    %241 = arith.mulf %239, %240 : vector<8x32xf32>
    %c1_108 = arith.constant 1 : index
    %c0_109 = arith.constant 0 : index
    %c0_110 = arith.constant 0 : index
    %242 = vector.load %arg11[%c1_108, %c0_109, %c0_110] : memref<2x32x96xbf16, #tpu.memory_space<vmem>>, vector<1x32x96xbf16>
    %243 = vector.shape_cast %242 : vector<1x32x96xbf16> to vector<32x96xbf16>
    %244 = arith.truncf %241 : vector<8x32xf32> to vector<8x32xbf16>
    %cst_111 = arith.constant dense<0.000000e+00> : vector<8x96xf32>
    %245 = tpu.matmul %244, %243, %cst_111 {dimension_numbers = #tpu.dot_dimension_numbers<[1], [0], [0], [1], [0, 0, 1, 1], [], []>} : vector<8x32xbf16>, vector<32x96xbf16>, vector<8x96xf32> -> vector<8x96xf32>
    %c1_112 = arith.constant 1 : index
    %c0_113 = arith.constant 0 : index
    %c0_114 = arith.constant 0 : index
    %246 = vector.load %arg12[%c1_112, %c0_113, %c0_114] : memref<2x1x96xf32, #tpu.memory_space<vmem>>, vector<1x1x96xf32>
    %247 = vector.shape_cast %246 : vector<1x1x96xf32> to vector<1x96xf32>
    %248 = vector.broadcast %247 : vector<1x96xf32> to vector<8x96xf32>
    %249 = arith.addf %245, %248 : vector<8x96xf32>
    %c1_115 = arith.constant 1 : index
    %c0_116 = arith.constant 0 : index
    %c0_117 = arith.constant 0 : index
    %250 = vector.load %arg13[%c1_115, %c0_116, %c0_117] : memref<2x16x96xbf16, #tpu.memory_space<vmem>>, vector<1x16x96xbf16>
    %251 = vector.shape_cast %250 : vector<1x16x96xbf16> to vector<16x96xbf16>
    %252 = arith.truncf %0 : vector<16x16xf32> to vector<16x16xbf16>
    %cst_118 = arith.constant dense<0.000000e+00> : vector<16x96xf32>
    %253 = tpu.matmul %252, %251, %cst_118 {dimension_numbers = #tpu.dot_dimension_numbers<[1], [0], [0], [1], [0, 0, 1, 1], [], []>} : vector<16x16xbf16>, vector<16x96xbf16>, vector<16x96xf32> -> vector<16x96xf32>
    %c1_119 = arith.constant 1 : index
    %c0_120 = arith.constant 0 : index
    %c0_121 = arith.constant 0 : index
    %254 = vector.load %arg14[%c1_119, %c0_120, %c0_121] : memref<2x1x96xf32, #tpu.memory_space<vmem>>, vector<1x1x96xf32>
    %255 = vector.shape_cast %254 : vector<1x1x96xf32> to vector<1x96xf32>
    %256 = vector.broadcast %255 : vector<1x96xf32> to vector<16x96xf32>
    %257 = arith.addf %253, %256 : vector<16x96xf32>
    %258 = arith.truncf %249 : vector<8x96xf32> to vector<8x96xbf16>
    %cst_122 = arith.constant dense<0.000000e+00> : vector<16x96xf32>
    %259 = tpu.matmul %2, %258, %cst_122 {dimension_numbers = #tpu.dot_dimension_numbers<[1], [0], [0], [1], [0, 0, 1, 1], [], []>} : vector<16x8xbf16>, vector<8x96xbf16>, vector<16x96xf32> -> vector<16x96xf32>
    %260 = vector.extract_strided_slice %201 {offsets = [0, 0], sizes = [8, 32], strides = [1, 1]} : vector<24x32xf32> to vector<8x32xf32>
    %261 = arith.truncf %260 : vector<8x32xf32> to vector<8x32xbf16>
    %cst_123 = arith.constant dense<0.000000e+00> : vector<16x32xf32>
    %262 = tpu.matmul %2, %261, %cst_123 {dimension_numbers = #tpu.dot_dimension_numbers<[1], [0], [0], [1], [0, 0, 1, 1], [], []>} : vector<16x8xbf16>, vector<8x32xbf16>, vector<16x32xf32> -> vector<16x32xf32>
    %263 = vector.extract_strided_slice %201 {offsets = [8, 0], sizes = [8, 32], strides = [1, 1]} : vector<24x32xf32> to vector<8x32xf32>
    %264 = arith.truncf %263 : vector<8x32xf32> to vector<8x32xbf16>
    %cst_124 = arith.constant dense<0.000000e+00> : vector<16x32xf32>
    %265 = tpu.matmul %2, %264, %cst_124 {dimension_numbers = #tpu.dot_dimension_numbers<[1], [0], [0], [1], [0, 0, 1, 1], [], []>} : vector<16x8xbf16>, vector<8x32xbf16>, vector<16x32xf32> -> vector<16x32xf32>
    %266 = vector.extract_strided_slice %201 {offsets = [16, 0], sizes = [8, 32], strides = [1, 1]} : vector<24x32xf32> to vector<8x32xf32>
    %267 = arith.truncf %266 : vector<8x32xf32> to vector<8x32xbf16>
    %cst_125 = arith.constant dense<0.000000e+00> : vector<16x32xf32>
    %268 = tpu.matmul %2, %267, %cst_125 {dimension_numbers = #tpu.dot_dimension_numbers<[1], [0], [0], [1], [0, 0, 1, 1], [], []>} : vector<16x8xbf16>, vector<8x32xbf16>, vector<16x32xf32> -> vector<16x32xf32>
    %269 = vector.extract_strided_slice %259 {offsets = [0, 0], sizes = [16, 32], strides = [1, 1]} : vector<16x96xf32> to vector<16x32xf32>
    %270 = vector.extract_strided_slice %257 {offsets = [0, 0], sizes = [16, 32], strides = [1, 1]} : vector<16x96xf32> to vector<16x32xf32>
    %271 = arith.mulf %269, %270 : vector<16x32xf32>
    %272 = vector.extract_strided_slice %259 {offsets = [0, 32], sizes = [16, 32], strides = [1, 1]} : vector<16x96xf32> to vector<16x32xf32>
    %273 = vector.extract_strided_slice %257 {offsets = [0, 32], sizes = [16, 32], strides = [1, 1]} : vector<16x96xf32> to vector<16x32xf32>
    %274 = arith.mulf %272, %273 : vector<16x32xf32>
    %cst_126 = arith.constant 0.577350259 : f32
    %275 = vector.broadcast %cst_126 : f32 to vector<16x32xf32>
    %276 = arith.mulf %274, %275 : vector<16x32xf32>
    %277 = vector.extract_strided_slice %259 {offsets = [0, 64], sizes = [16, 32], strides = [1, 1]} : vector<16x96xf32> to vector<16x32xf32>
    %278 = vector.extract_strided_slice %257 {offsets = [0, 64], sizes = [16, 32], strides = [1, 1]} : vector<16x96xf32> to vector<16x32xf32>
    %279 = arith.mulf %277, %278 : vector<16x32xf32>
    %280 = arith.truncf %271 : vector<16x32xf32> to vector<16x32xbf16>
    %cst_127 = arith.constant dense<0.000000e+00> : vector<8x32xf32>
    %281 = tpu.matmul %3, %280, %cst_127 {dimension_numbers = #tpu.dot_dimension_numbers<[1], [0], [0], [1], [0, 0, 1, 1], [], []>} : vector<8x16xbf16>, vector<16x32xbf16>, vector<8x32xf32> -> vector<8x32xf32>
    %282 = arith.addf %191, %281 : vector<8x32xf32>
    %cst_128 = arith.constant 0.707106769 : f32
    %283 = vector.broadcast %cst_128 : f32 to vector<8x32xf32>
    %284 = arith.mulf %282, %283 : vector<8x32xf32>
    %285 = arith.mulf %262, %276 : vector<16x32xf32>
    %286 = vector.extract_strided_slice %1 {offsets = [0, 0], sizes = [16, 32], strides = [1, 1]} : vector<48x32xf32> to vector<16x32xf32>
    %287 = arith.mulf %279, %286 : vector<16x32xf32>
    %288 = arith.addf %285, %287 : vector<16x32xf32>
    %cst_129 = arith.constant 0.176776692 : f32
    %289 = vector.broadcast %cst_129 : f32 to vector<16x32xf32>
    %290 = arith.mulf %288, %289 : vector<16x32xf32>
    %291 = arith.truncf %290 : vector<16x32xf32> to vector<16x32xbf16>
    %cst_130 = arith.constant dense<0.000000e+00> : vector<8x32xf32>
    %292 = tpu.matmul %3, %291, %cst_130 {dimension_numbers = #tpu.dot_dimension_numbers<[1], [0], [0], [1], [0, 0, 1, 1], [], []>} : vector<8x16xbf16>, vector<16x32xbf16>, vector<8x32xf32> -> vector<8x32xf32>
    %293 = vector.extract_strided_slice %201 {offsets = [0, 0], sizes = [8, 32], strides = [1, 1]} : vector<24x32xf32> to vector<8x32xf32>
    %294 = arith.addf %293, %292 : vector<8x32xf32>
    %295 = arith.mulf %265, %276 : vector<16x32xf32>
    %296 = vector.extract_strided_slice %1 {offsets = [16, 0], sizes = [16, 32], strides = [1, 1]} : vector<48x32xf32> to vector<16x32xf32>
    %297 = arith.mulf %279, %296 : vector<16x32xf32>
    %298 = arith.addf %295, %297 : vector<16x32xf32>
    %cst_131 = arith.constant 0.176776692 : f32
    %299 = vector.broadcast %cst_131 : f32 to vector<16x32xf32>
    %300 = arith.mulf %298, %299 : vector<16x32xf32>
    %301 = arith.truncf %300 : vector<16x32xf32> to vector<16x32xbf16>
    %cst_132 = arith.constant dense<0.000000e+00> : vector<8x32xf32>
    %302 = tpu.matmul %3, %301, %cst_132 {dimension_numbers = #tpu.dot_dimension_numbers<[1], [0], [0], [1], [0, 0, 1, 1], [], []>} : vector<8x16xbf16>, vector<16x32xbf16>, vector<8x32xf32> -> vector<8x32xf32>
    %303 = vector.extract_strided_slice %201 {offsets = [8, 0], sizes = [8, 32], strides = [1, 1]} : vector<24x32xf32> to vector<8x32xf32>
    %304 = arith.addf %303, %302 : vector<8x32xf32>
    %305 = arith.mulf %268, %276 : vector<16x32xf32>
    %306 = vector.extract_strided_slice %1 {offsets = [32, 0], sizes = [16, 32], strides = [1, 1]} : vector<48x32xf32> to vector<16x32xf32>
    %307 = arith.mulf %279, %306 : vector<16x32xf32>
    %308 = arith.addf %305, %307 : vector<16x32xf32>
    %cst_133 = arith.constant 0.176776692 : f32
    %309 = vector.broadcast %cst_133 : f32 to vector<16x32xf32>
    %310 = arith.mulf %308, %309 : vector<16x32xf32>
    %311 = arith.truncf %310 : vector<16x32xf32> to vector<16x32xbf16>
    %cst_134 = arith.constant dense<0.000000e+00> : vector<8x32xf32>
    %312 = tpu.matmul %3, %311, %cst_134 {dimension_numbers = #tpu.dot_dimension_numbers<[1], [0], [0], [1], [0, 0, 1, 1], [], []>} : vector<8x16xbf16>, vector<16x32xbf16>, vector<8x32xf32> -> vector<8x32xf32>
    %313 = vector.extract_strided_slice %201 {offsets = [16, 0], sizes = [8, 32], strides = [1, 1]} : vector<24x32xf32> to vector<8x32xf32>
    %314 = arith.addf %313, %312 : vector<8x32xf32>
    %315 = tpu.concatenate %294, %304, %314 in 0 : vector<8x32xf32>, vector<8x32xf32>, vector<8x32xf32> -> vector<24x32xf32>
    %c1_135 = arith.constant 1 : index
    %c0_136 = arith.constant 0 : index
    %c0_137 = arith.constant 0 : index
    %316 = vector.load %arg15[%c1_135, %c0_136, %c0_137] : memref<2x32x64xbf16, #tpu.memory_space<vmem>>, vector<1x32x64xbf16>
    %317 = vector.shape_cast %316 : vector<1x32x64xbf16> to vector<32x64xbf16>
    %318 = arith.truncf %315 : vector<24x32xf32> to vector<24x32xbf16>
    %cst_138 = arith.constant dense<0.000000e+00> : vector<24x64xf32>
    %319 = tpu.matmul %318, %317, %cst_138 {dimension_numbers = #tpu.dot_dimension_numbers<[1], [0], [0], [1], [0, 0, 1, 1], [], []>} : vector<24x32xbf16>, vector<32x64xbf16>, vector<24x64xf32> -> vector<24x64xf32>
    %320 = vector.extract_strided_slice %319 {offsets = [0, 0], sizes = [24, 32], strides = [1, 1]} : vector<24x64xf32> to vector<24x32xf32>
    %321 = vector.extract_strided_slice %319 {offsets = [0, 32], sizes = [24, 32], strides = [1, 1]} : vector<24x64xf32> to vector<24x32xf32>
    %322 = vector.extract_strided_slice %320 {offsets = [0, 0], sizes = [8, 32], strides = [1, 1]} : vector<24x32xf32> to vector<8x32xf32>
    %323 = vector.extract_strided_slice %320 {offsets = [8, 0], sizes = [8, 32], strides = [1, 1]} : vector<24x32xf32> to vector<8x32xf32>
    %324 = vector.extract_strided_slice %320 {offsets = [16, 0], sizes = [8, 32], strides = [1, 1]} : vector<24x32xf32> to vector<8x32xf32>
    %325 = vector.extract_strided_slice %321 {offsets = [0, 0], sizes = [8, 32], strides = [1, 1]} : vector<24x32xf32> to vector<8x32xf32>
    %326 = vector.extract_strided_slice %321 {offsets = [8, 0], sizes = [8, 32], strides = [1, 1]} : vector<24x32xf32> to vector<8x32xf32>
    %327 = vector.extract_strided_slice %321 {offsets = [16, 0], sizes = [8, 32], strides = [1, 1]} : vector<24x32xf32> to vector<8x32xf32>
    %328 = arith.mulf %322, %325 : vector<8x32xf32>
    %329 = arith.mulf %323, %326 : vector<8x32xf32>
    %330 = arith.addf %328, %329 : vector<8x32xf32>
    %331 = arith.mulf %324, %327 : vector<8x32xf32>
    %332 = arith.addf %330, %331 : vector<8x32xf32>
    %cst_139 = arith.constant 0.176776692 : f32
    %333 = vector.broadcast %cst_139 : f32 to vector<8x32xf32>
    %334 = arith.mulf %332, %333 : vector<8x32xf32>
    %335 = arith.mulf %325, %325 : vector<8x32xf32>
    %336 = arith.mulf %326, %326 : vector<8x32xf32>
    %337 = arith.addf %335, %336 : vector<8x32xf32>
    %338 = arith.mulf %327, %327 : vector<8x32xf32>
    %339 = arith.addf %337, %338 : vector<8x32xf32>
    %cst_140 = arith.constant 9.99999993E-9 : f32
    %340 = vector.broadcast %cst_140 : f32 to vector<8x32xf32>
    %341 = arith.addf %339, %340 : vector<8x32xf32>
    %342 = math.sqrt %341 : vector<8x32xf32>
    %c1_141 = arith.constant 1 : index
    %c0_142 = arith.constant 0 : index
    %c0_143 = arith.constant 0 : index
    %343 = vector.load %arg16[%c1_141, %c0_142, %c0_143] : memref<2x32x32xbf16, #tpu.memory_space<vmem>>, vector<1x32x32xbf16>
    %344 = vector.shape_cast %343 : vector<1x32x32xbf16> to vector<32x32xbf16>
    %345 = arith.truncf %284 : vector<8x32xf32> to vector<8x32xbf16>
    %cst_144 = arith.constant dense<0.000000e+00> : vector<8x32xf32>
    %346 = tpu.matmul %345, %344, %cst_144 {dimension_numbers = #tpu.dot_dimension_numbers<[1], [0], [0], [1], [0, 0, 1, 1], [], []>} : vector<8x32xbf16>, vector<32x32xbf16>, vector<8x32xf32> -> vector<8x32xf32>
    %c1_145 = arith.constant 1 : index
    %c0_146 = arith.constant 0 : index
    %c0_147 = arith.constant 0 : index
    %347 = vector.load %arg17[%c1_145, %c0_146, %c0_147] : memref<2x32x32xbf16, #tpu.memory_space<vmem>>, vector<1x32x32xbf16>
    %348 = vector.shape_cast %347 : vector<1x32x32xbf16> to vector<32x32xbf16>
    %349 = arith.truncf %342 : vector<8x32xf32> to vector<8x32xbf16>
    %cst_148 = arith.constant dense<0.000000e+00> : vector<8x32xf32>
    %350 = tpu.matmul %349, %348, %cst_148 {dimension_numbers = #tpu.dot_dimension_numbers<[1], [0], [0], [1], [0, 0, 1, 1], [], []>} : vector<8x32xbf16>, vector<32x32xbf16>, vector<8x32xf32> -> vector<8x32xf32>
    %351 = arith.addf %346, %350 : vector<8x32xf32>
    %c1_149 = arith.constant 1 : index
    %c0_150 = arith.constant 0 : index
    %c0_151 = arith.constant 0 : index
    %352 = vector.load %arg18[%c1_149, %c0_150, %c0_151] : memref<2x1x32xf32, #tpu.memory_space<vmem>>, vector<1x1x32xf32>
    %353 = vector.shape_cast %352 : vector<1x1x32xf32> to vector<1x32xf32>
    %354 = vector.broadcast %353 : vector<1x32xf32> to vector<8x32xf32>
    %355 = arith.addf %351, %354 : vector<8x32xf32>
    %356 = arith.negf %355 : vector<8x32xf32>
    %357 = math.exp %356 : vector<8x32xf32>
    %cst_152 = arith.constant 1.000000e+00 : f32
    %358 = vector.broadcast %cst_152 : f32 to vector<8x32xf32>
    %359 = arith.addf %358, %357 : vector<8x32xf32>
    %360 = arith.divf %358, %359 : vector<8x32xf32>
    %361 = arith.mulf %355, %360 : vector<8x32xf32>
    %cst_153 = arith.constant 1.66666663 : f32
    %362 = vector.broadcast %cst_153 : f32 to vector<8x32xf32>
    %363 = arith.mulf %361, %362 : vector<8x32xf32>
    %c1_154 = arith.constant 1 : index
    %c0_155 = arith.constant 0 : index
    %c0_156 = arith.constant 0 : index
    %364 = vector.load %arg19[%c1_154, %c0_155, %c0_156] : memref<2x32x96xbf16, #tpu.memory_space<vmem>>, vector<1x32x96xbf16>
    %365 = vector.shape_cast %364 : vector<1x32x96xbf16> to vector<32x96xbf16>
    %366 = arith.truncf %363 : vector<8x32xf32> to vector<8x32xbf16>
    %cst_157 = arith.constant dense<0.000000e+00> : vector<8x96xf32>
    %367 = tpu.matmul %366, %365, %cst_157 {dimension_numbers = #tpu.dot_dimension_numbers<[1], [0], [0], [1], [0, 0, 1, 1], [], []>} : vector<8x32xbf16>, vector<32x96xbf16>, vector<8x96xf32> -> vector<8x96xf32>
    %c1_158 = arith.constant 1 : index
    %c0_159 = arith.constant 0 : index
    %c0_160 = arith.constant 0 : index
    %368 = vector.load %arg20[%c1_158, %c0_159, %c0_160] : memref<2x1x96xf32, #tpu.memory_space<vmem>>, vector<1x1x96xf32>
    %369 = vector.shape_cast %368 : vector<1x1x96xf32> to vector<1x96xf32>
    %370 = vector.broadcast %369 : vector<1x96xf32> to vector<8x96xf32>
    %371 = arith.addf %367, %370 : vector<8x96xf32>
    %372 = vector.extract_strided_slice %371 {offsets = [0, 0], sizes = [8, 32], strides = [1, 1]} : vector<8x96xf32> to vector<8x32xf32>
    %373 = vector.extract_strided_slice %371 {offsets = [0, 32], sizes = [8, 32], strides = [1, 1]} : vector<8x96xf32> to vector<8x32xf32>
    %374 = vector.extract_strided_slice %371 {offsets = [0, 64], sizes = [8, 32], strides = [1, 1]} : vector<8x96xf32> to vector<8x32xf32>
    %375 = arith.mulf %373, %334 : vector<8x32xf32>
    %376 = arith.addf %372, %375 : vector<8x32xf32>
    %cst_161 = arith.constant 0.707106769 : f32
    %377 = vector.broadcast %cst_161 : f32 to vector<8x32xf32>
    %378 = arith.mulf %376, %377 : vector<8x32xf32>
    %379 = arith.addf %284, %378 : vector<8x32xf32>
    %cst_162 = arith.constant 0.707106769 : f32
    %380 = vector.broadcast %cst_162 : f32 to vector<8x32xf32>
    %381 = arith.mulf %379, %380 : vector<8x32xf32>
    %382 = vector.extract_strided_slice %315 {offsets = [0, 0], sizes = [8, 32], strides = [1, 1]} : vector<24x32xf32> to vector<8x32xf32>
    %383 = arith.mulf %322, %374 : vector<8x32xf32>
    %384 = arith.addf %382, %383 : vector<8x32xf32>
    %385 = vector.extract_strided_slice %315 {offsets = [8, 0], sizes = [8, 32], strides = [1, 1]} : vector<24x32xf32> to vector<8x32xf32>
    %386 = arith.mulf %323, %374 : vector<8x32xf32>
    %387 = arith.addf %385, %386 : vector<8x32xf32>
    %388 = vector.extract_strided_slice %315 {offsets = [16, 0], sizes = [8, 32], strides = [1, 1]} : vector<24x32xf32> to vector<8x32xf32>
    %389 = arith.mulf %324, %374 : vector<8x32xf32>
    %390 = arith.addf %388, %389 : vector<8x32xf32>
    %391 = tpu.concatenate %384, %387, %390 in 0 : vector<8x32xf32>, vector<8x32xf32>, vector<8x32xf32> -> vector<24x32xf32>
    %c0_163 = arith.constant 0 : index
    %c0_164 = arith.constant 0 : index
    %392 = vector.load %arg21[%c0_163, %c0_164] : memref<32x32xbf16, #tpu.memory_space<vmem>>, vector<32x32xbf16>
    %393 = arith.truncf %391 : vector<24x32xf32> to vector<24x32xbf16>
    %cst_165 = arith.constant dense<0.000000e+00> : vector<24x32xf32>
    %394 = tpu.matmul %393, %392, %cst_165 {dimension_numbers = #tpu.dot_dimension_numbers<[1], [0], [0], [1], [0, 0, 1, 1], [], []>} : vector<24x32xbf16>, vector<32x32xbf16>, vector<24x32xf32> -> vector<24x32xf32>
    %c0_166 = arith.constant 0 : index
    %c0_167 = arith.constant 0 : index
    %395 = vector.load %arg22[%c0_166, %c0_167] : memref<32x16xbf16, #tpu.memory_space<vmem>>, vector<32x16xbf16>
    %396 = arith.truncf %391 : vector<24x32xf32> to vector<24x32xbf16>
    %cst_168 = arith.constant dense<0.000000e+00> : vector<24x16xf32>
    %397 = tpu.matmul %396, %395, %cst_168 {dimension_numbers = #tpu.dot_dimension_numbers<[1], [0], [0], [1], [0, 0, 1, 1], [], []>} : vector<24x32xbf16>, vector<32x16xbf16>, vector<24x16xf32> -> vector<24x16xf32>
    %398 = vector.extract_strided_slice %394 {offsets = [0, 0], sizes = [8, 32], strides = [1, 1]} : vector<24x32xf32> to vector<8x32xf32>
    %399 = vector.extract_strided_slice %394 {offsets = [8, 0], sizes = [8, 32], strides = [1, 1]} : vector<24x32xf32> to vector<8x32xf32>
    %400 = vector.extract_strided_slice %394 {offsets = [16, 0], sizes = [8, 32], strides = [1, 1]} : vector<24x32xf32> to vector<8x32xf32>
    %401 = arith.mulf %398, %398 : vector<8x32xf32>
    %402 = arith.mulf %399, %399 : vector<8x32xf32>
    %403 = arith.addf %401, %402 : vector<8x32xf32>
    %404 = arith.mulf %400, %400 : vector<8x32xf32>
    %405 = arith.addf %403, %404 : vector<8x32xf32>
    %406 = math.sqrt %405 : vector<8x32xf32>
    %c0_169 = arith.constant 0 : index
    %c0_170 = arith.constant 0 : index
    %407 = vector.load %arg23[%c0_169, %c0_170] : memref<32x32xbf16, #tpu.memory_space<vmem>>, vector<32x32xbf16>
    %408 = arith.truncf %381 : vector<8x32xf32> to vector<8x32xbf16>
    %cst_171 = arith.constant dense<0.000000e+00> : vector<8x32xf32>
    %409 = tpu.matmul %408, %407, %cst_171 {dimension_numbers = #tpu.dot_dimension_numbers<[1], [0], [0], [1], [0, 0, 1, 1], [], []>} : vector<8x32xbf16>, vector<32x32xbf16>, vector<8x32xf32> -> vector<8x32xf32>
    %c0_172 = arith.constant 0 : index
    %c0_173 = arith.constant 0 : index
    %410 = vector.load %arg24[%c0_172, %c0_173] : memref<32x32xbf16, #tpu.memory_space<vmem>>, vector<32x32xbf16>
    %411 = arith.truncf %406 : vector<8x32xf32> to vector<8x32xbf16>
    %cst_174 = arith.constant dense<0.000000e+00> : vector<8x32xf32>
    %412 = tpu.matmul %411, %410, %cst_174 {dimension_numbers = #tpu.dot_dimension_numbers<[1], [0], [0], [1], [0, 0, 1, 1], [], []>} : vector<8x32xbf16>, vector<32x32xbf16>, vector<8x32xf32> -> vector<8x32xf32>
    %413 = arith.addf %409, %412 : vector<8x32xf32>
    %c0_175 = arith.constant 0 : index
    %c0_176 = arith.constant 0 : index
    %414 = vector.load %arg25[%c0_175, %c0_176] : memref<1x32xf32, #tpu.memory_space<vmem>>, vector<1x32xf32>
    %415 = vector.broadcast %414 : vector<1x32xf32> to vector<8x32xf32>
    %416 = arith.addf %413, %415 : vector<8x32xf32>
    %417 = arith.negf %416 : vector<8x32xf32>
    %418 = math.exp %417 : vector<8x32xf32>
    %cst_177 = arith.constant 1.000000e+00 : f32
    %419 = vector.broadcast %cst_177 : f32 to vector<8x32xf32>
    %420 = arith.addf %419, %418 : vector<8x32xf32>
    %421 = arith.divf %419, %420 : vector<8x32xf32>
    %422 = arith.mulf %416, %421 : vector<8x32xf32>
    %cst_178 = arith.constant 1.66666663 : f32
    %423 = vector.broadcast %cst_178 : f32 to vector<8x32xf32>
    %424 = arith.mulf %422, %423 : vector<8x32xf32>
    %c0_179 = arith.constant 0 : index
    %c0_180 = arith.constant 0 : index
    %425 = vector.load %arg26[%c0_179, %c0_180] : memref<32x32xbf16, #tpu.memory_space<vmem>>, vector<32x32xbf16>
    %426 = arith.truncf %424 : vector<8x32xf32> to vector<8x32xbf16>
    %cst_181 = arith.constant dense<0.000000e+00> : vector<8x32xf32>
    %427 = tpu.matmul %426, %425, %cst_181 {dimension_numbers = #tpu.dot_dimension_numbers<[1], [0], [0], [1], [0, 0, 1, 1], [], []>} : vector<8x32xbf16>, vector<32x32xbf16>, vector<8x32xf32> -> vector<8x32xf32>
    %c0_182 = arith.constant 0 : index
    %c0_183 = arith.constant 0 : index
    %428 = vector.load %arg27[%c0_182, %c0_183] : memref<1x32xf32, #tpu.memory_space<vmem>>, vector<1x32xf32>
    %429 = vector.broadcast %428 : vector<1x32xf32> to vector<8x32xf32>
    %430 = arith.addf %427, %429 : vector<8x32xf32>
    %431 = vector.extract_strided_slice %430 {offsets = [0, 0], sizes = [8, 16], strides = [1, 1]} : vector<8x32xf32> to vector<8x16xf32>
    %432 = arith.negf %431 : vector<8x16xf32>
    %433 = math.exp %432 : vector<8x16xf32>
    %cst_184 = arith.constant 1.000000e+00 : f32
    %434 = vector.broadcast %cst_184 : f32 to vector<8x16xf32>
    %435 = arith.addf %434, %433 : vector<8x16xf32>
    %436 = arith.divf %434, %435 : vector<8x16xf32>
    %437 = arith.mulf %431, %436 : vector<8x16xf32>
    %cst_185 = arith.constant 1.66666663 : f32
    %438 = vector.broadcast %cst_185 : f32 to vector<8x16xf32>
    %439 = arith.mulf %437, %438 : vector<8x16xf32>
    %440 = vector.extract_strided_slice %430 {offsets = [0, 16], sizes = [8, 16], strides = [1, 1]} : vector<8x32xf32> to vector<8x16xf32>
    %c0_186 = arith.constant 0 : index
    %c0_187 = arith.constant 0 : index
    %441 = vector.load %arg28[%c0_186, %c0_187] : memref<8x16xf32, #tpu.memory_space<vmem>>, vector<8x16xf32>
    tpu.vector_store %arg28[%c0_186, %c0_187], %439 {strides = array<i32>} : memref<8x16xf32, #tpu.memory_space<vmem>>, vector<8x16xf32>,
    %442 = vector.extract_strided_slice %397 {offsets = [0, 0], sizes = [8, 16], strides = [1, 1]} : vector<24x16xf32> to vector<8x16xf32>
    %443 = arith.mulf %442, %440 : vector<8x16xf32>
    %c0_188 = arith.constant 0 : index
    %c0_189 = arith.constant 0 : index
    %444 = vector.load %arg29[%c0_188, %c0_189] : memref<24x16xf32, #tpu.memory_space<vmem>>, vector<8x16xf32>
    tpu.vector_store %arg29[%c0_188, %c0_189], %443 {strides = array<i32>} : memref<24x16xf32, #tpu.memory_space<vmem>>, vector<8x16xf32>,
    %445 = vector.extract_strided_slice %397 {offsets = [8, 0], sizes = [8, 16], strides = [1, 1]} : vector<24x16xf32> to vector<8x16xf32>
    %446 = arith.mulf %445, %440 : vector<8x16xf32>
    %c8 = arith.constant 8 : index
    %c0_190 = arith.constant 0 : index
    %447 = vector.load %arg29[%c8, %c0_190] : memref<24x16xf32, #tpu.memory_space<vmem>>, vector<8x16xf32>
    tpu.vector_store %arg29[%c8, %c0_190], %446 {strides = array<i32>} : memref<24x16xf32, #tpu.memory_space<vmem>>, vector<8x16xf32>,
    %448 = vector.extract_strided_slice %397 {offsets = [16, 0], sizes = [8, 16], strides = [1, 1]} : vector<24x16xf32> to vector<8x16xf32>
    %449 = arith.mulf %448, %440 : vector<8x16xf32>
    %c16 = arith.constant 16 : index
    %c0_191 = arith.constant 0 : index
    %450 = vector.load %arg29[%c16, %c0_191] : memref<24x16xf32, #tpu.memory_space<vmem>>, vector<8x16xf32>
    tpu.vector_store %arg29[%c16, %c0_191], %449 {strides = array<i32>} : memref<24x16xf32, #tpu.memory_space<vmem>>, vector<8x16xf32>,
    return
  }
}

</mosaic_0001>

<llo_original>
// kernel: tpu_custom_call.1
$region0: #{tpu_custom_call.1}
  #allocation0 [shape = 'u32[]', space=smem, size = 0x4, offset = 0x4, fixed_abs, tag = 'smem constant byte address 0x4 - core index']
  #allocation1 [shape = 'u32[72,128]{1,0:T(1,128)}', space=vmem, size = 0x9000, scoped, tag = 'internal scratch']
  %s0 = inlined_call_operand.smem [shape: u32[30], index: -1, kind: input, shape index: {}]
  %s1 = sld [smem:[%s0]]
  %s2 = scalar_lea.smem %s0, 1
  %s3 = sld [smem:[%s2]]
  %s4 = scalar_lea.smem %s0, 2
  %s5 = sld [smem:[%s4]]
  %s6 = scalar_lea.smem %s0, 3
  %s7 = sld [smem:[%s6]]
  %s8 = scalar_lea.smem %s0, 4
  %s9 = sld [smem:[%s8]]
  %s10 = scalar_lea.smem %s0, 5
  %s11 = sld [smem:[%s10]]
  %s12 = scalar_lea.smem %s0, 6
  %s13 = sld [smem:[%s12]]
  %s14 = scalar_lea.smem %s0, 7
  %s15 = sld [smem:[%s14]]
  %s16 = scalar_lea.smem %s0, 8
  %s17 = sld [smem:[%s16]]
  %s18 = scalar_lea.smem %s0, 9
  %s19 = sld [smem:[%s18]]
  %s20 = scalar_lea.smem %s0, 10
  %s21 = sld [smem:[%s20]]
  %s22 = scalar_lea.smem %s0, 11
  %s23 = sld [smem:[%s22]]
  %s24 = scalar_lea.smem %s0, 12
  %s25 = sld [smem:[%s24]]
  %s26 = scalar_lea.smem %s0, 13
  %s27 = sld [smem:[%s26]]
  %s28 = scalar_lea.smem %s0, 14
  %s29 = sld [smem:[%s28]]
  %s30 = scalar_lea.smem %s0, 15
  %s31 = sld [smem:[%s30]]
  %s32 = scalar_lea.smem %s0, 16
  %s33 = sld [smem:[%s32]]
  %s34 = scalar_lea.smem %s0, 17
  %s35 = sld [smem:[%s34]]
  %s36 = scalar_lea.smem %s0, 18
  %s37 = sld [smem:[%s36]]
  %s38 = scalar_lea.smem %s0, 19
  %s39 = sld [smem:[%s38]]
  %s40 = scalar_lea.smem %s0, 20
  %s41 = sld [smem:[%s40]]
  %s42 = scalar_lea.smem %s0, 21
  %s43 = sld [smem:[%s42]]
  %s44 = scalar_lea.smem %s0, 22
  %s45 = sld [smem:[%s44]]
  %s46 = scalar_lea.smem %s0, 23
  %s47 = sld [smem:[%s46]]
  %s48 = scalar_lea.smem %s0, 24
  %s49 = sld [smem:[%s48]]
  %s50 = scalar_lea.smem %s0, 25
  %s51 = sld [smem:[%s50]]
  %s52 = scalar_lea.smem %s0, 26
  %s53 = sld [smem:[%s52]]
  %s54 = scalar_lea.smem %s0, 27
  %s55 = sld [smem:[%s54]]
  %s56 = scalar_lea.smem %s0, 28
  %s57 = sld [smem:[%s56]]
  %s58 = scalar_lea.smem %s0, 29
  %s59 = sld [smem:[%s58]]
  %60 = xla_tuple %s57, %s59
  %s61 = sld [smem:[#allocation0]]
  $region194: #{tpu_custom_call.1} parent=0
    _
  %s63 = ssub.s32 1, %s61
  %s64 = scalar_select 0, %s63, %s61
  $region1: #{tpu_custom_call.1} parent=0
    #allocation2 [shape = 'u8[4096]{0}', space=vmem, size = 0x1000, scoped, tag = 'input window, operand 0, single buffered']
    #allocation3 [shape = 's32[1]{0}', space=sflag, size = 0x4, scoped, tag = 'scoped memory for tpu_custom_call.1']
    #allocation4 [shape = 's32[1]{0}', space=sflag, size = 0x4, scoped, tag = 'scoped memory for tpu_custom_call.1']
    #allocation5 [shape = 'u8[8192]{0}', space=vmem, size = 0x2000, scoped, tag = 'input window, operand 1, single buffered']
    #allocation6 [shape = 's32[1]{0}', space=sflag, size = 0x4, scoped, tag = 'scoped memory for tpu_custom_call.1']
    #allocation7 [shape = 'u8[2048]{0}', space=vmem, size = 0x800, scoped, tag = 'input window, operand 4, single buffered']
    #allocation8 [shape = 'u8[512]{0}', space=vmem, size = 0x400, scoped, tag = 'input window, operand 6, single buffered']
    #allocation9 [shape = 's32[1]{0}', space=sflag, size = 0x4, scoped, tag = 'scoped memory for tpu_custom_call.1']
    #allocation10 [shape = 'u8[1024]{0}', space=vmem, size = 0x400, scoped, tag = 'input window, operand 7, single buffered']
    #allocation11 [shape = 'u8[1024]{0}', space=vmem, size = 0x400, scoped, tag = 'input window, operand 8, single buffered']
    #allocation12 [shape = 's32[1]{0}', space=sflag, size = 0x4, scoped, tag = 'scoped memory for tpu_custom_call.1']
    #allocation13 [shape = 'u8[1024]{0}', space=vmem, size = 0x400, scoped, tag = 'input window, operand 10, single buffered']
    #allocation14 [shape = 'u8[1024]{0}', space=vmem, size = 0x400, scoped, tag = 'input window, operand 12, single buffered']
    #allocation15 [shape = 's32[1]{0}', space=sflag, size = 0x4, scoped, tag = 'scoped memory for tpu_custom_call.1']
    #allocation16 [shape = 'u8[8192]{0}', space=vmem, size = 0x2000, scoped, tag = 'input window, operand 13, single buffered']
    #allocation17 [shape = 'u8[1024]{0}', space=vmem, size = 0x400, scoped, tag = 'input window, operand 14, single buffered']
    #allocation18 [shape = 's32[1]{0}', space=sflag, size = 0x4, scoped, tag = 'scoped memory for tpu_custom_call.1']
    #allocation19 [shape = 'u8[1024]{0}', space=vmem, size = 0x400, scoped, tag = 'input window, operand 18, single buffered']
    #allocation20 [shape = 'u8[16384]{0}', space=vmem, size = 0x4000, scoped, tag = 'input window, operand 19, single buffered']
    #allocation21 [shape = 's32[1]{0}', space=sflag, size = 0x4, scoped, tag = 'scoped memory for tpu_custom_call.1']
    #allocation22 [shape = 'u8[1024]{0}', space=vmem, size = 0x400, scoped, tag = 'input window, operand 20, single buffered']
    #allocation23 [shape = 'u8[8192]{0}', space=vmem, size = 0x2000, scoped, tag = 'input window, operand 23, single buffered']
    #allocation24 [shape = 's32[1]{0}', space=sflag, size = 0x4, scoped, tag = 'scoped memory for tpu_custom_call.1']
    #allocation25 [shape = 'u8[8192]{0}', space=vmem, size = 0x2000, scoped, tag = 'input window, operand 24, single buffered']
    #allocation26 [shape = 'u8[8192]{0}', space=vmem, size = 0x2000, scoped, tag = 'input window, operand 26, single buffered']
    #allocation27 [shape = 's32[1]{0}', space=sflag, size = 0x4, scoped, tag = 'scoped memory for tpu_custom_call.1']
    #allocation28 [shape = 'u8[4096]{0}', space=vmem, size = 0x1000, scoped, tag = 'output window, operand 0, single buffered']
    %65 = vsyncpa [#allocation3], 0
    %66 = vsyncpa [#allocation6], 0
    %67 = vsyncpa [#allocation9], 0
    %68 = vsyncpa [#allocation12], 0
    %69 = vsyncpa [#allocation15], 0
    %70 = vsyncpa [#allocation18], 0
    %71 = vsyncpa [#allocation21], 0
    %72 = vsyncpa [#allocation24], 0
    %73 = vsyncpa [#allocation27], 0
    %74 = vsyncpa [#allocation4], 0
    // Predicated region
    $region2: #{tpu_custom_call.1} parent=1 // pred_check
      _
    $region3: #{tpu_custom_call.1} parent=1 // pred_check_branch
      %76 = sbr.rel (0) target = $region5
    $region4: #{tpu_custom_call.1} parent=1 // pred_region
      %78 = vsyncadd [#allocation3], 0
      %s80 = sshll.u32 %s1, 4
      %s81 = int_to_ptr.hbm [resolvable:$true] %s80
      %s82 = sshll.u32 [#allocation2], 4
      %s83 = int_to_ptr.vmem [resolvable:$true] %s82
      %85 = dma.hbm_to_vmem [thread:$0]  %s81, 128, %s83, [#allocation3]
    $region5: #{tpu_custom_call.1} parent=1 // pred_fallthru
      _
    // Predicated region
    $region6: #{tpu_custom_call.1} parent=1 // pred_check
      _
    $region7: #{tpu_custom_call.1} parent=1 // pred_check_branch
      %87 = sbr.rel (0) target = $region9
    $region8: #{tpu_custom_call.1} parent=1 // pred_region
      %89 = vsyncadd [#allocation6], 0
      %s90 = sshll.u32 %s3, 4
      %s91 = int_to_ptr.hbm [resolvable:$true] %s90
      %s92 = sshll.u32 [#allocation5], 4
      %s93 = int_to_ptr.vmem [resolvable:$true] %s92
      %98 = dma.hbm_to_vmem [thread:$0]  %s91, 256, %s93, [#allocation6], 128, 128, 8
    $region9: #{tpu_custom_call.1} parent=1 // pred_fallthru
      _
    // Predicated region
    $region10: #{tpu_custom_call.1} parent=1 // pred_check
      _
    $region11: #{tpu_custom_call.1} parent=1 // pred_check_branch
      %100 = sbr.rel (0) target = $region13
    $region12: #{tpu_custom_call.1} parent=1 // pred_region
      _
    $region13: #{tpu_custom_call.1} parent=1 // pred_fallthru
      _
    // Predicated region
    $region14: #{tpu_custom_call.1} parent=1 // pred_check
      _
    $region15: #{tpu_custom_call.1} parent=1 // pred_check_branch
      %102 = sbr.rel (0) target = $region17
    $region16: #{tpu_custom_call.1} parent=1 // pred_region
      _
    $region17: #{tpu_custom_call.1} parent=1 // pred_fallthru
      _
    // Predicated region
    $region18: #{tpu_custom_call.1} parent=1 // pred_check
      _
    $region19: #{tpu_custom_call.1} parent=1 // pred_check_branch
      %104 = sbr.rel (0) target = $region21
    $region20: #{tpu_custom_call.1} parent=1 // pred_region
      %106 = vsyncadd [#allocation6], 0
      %s108 = sshll.u32 %s9, 4
      %s109 = int_to_ptr.hbm [resolvable:$true] %s108
      %s110 = sshll.u32 [#allocation7], 4
      %s111 = int_to_ptr.vmem [resolvable:$true] %s110
      %113 = dma.hbm_to_vmem [thread:$0]  %s109, 64, %s111, [#allocation6]
    $region21: #{tpu_custom_call.1} parent=1 // pred_fallthru
      _
    // Predicated region
    $region22: #{tpu_custom_call.1} parent=1 // pred_check
      _
    $region23: #{tpu_custom_call.1} parent=1 // pred_check_branch
      %115 = sbr.rel (0) target = $region25
    $region24: #{tpu_custom_call.1} parent=1 // pred_region
      _
    $region25: #{tpu_custom_call.1} parent=1 // pred_fallthru
      _
    // Predicated region
    $region26: #{tpu_custom_call.1} parent=1 // pred_check
      _
    $region27: #{tpu_custom_call.1} parent=1 // pred_check_branch
      %117 = sbr.rel (0) target = $region29
    $region28: #{tpu_custom_call.1} parent=1 // pred_region
      %119 = vsyncadd [#allocation9], 0
      %s121 = sshll.u32 %s13, 4
      %s122 = int_to_ptr.hbm [resolvable:$true] %s121
      %s123 = sshll.u32 [#allocation8], 4
      %s124 = int_to_ptr.vmem [resolvable:$true] %s123
      %126 = dma.hbm_to_vmem [thread:$0]  %s122, 16, %s124, [#allocation9]
    $region29: #{tpu_custom_call.1} parent=1 // pred_fallthru
      _
    // Predicated region
    $region30: #{tpu_custom_call.1} parent=1 // pred_check
      _
    $region31: #{tpu_custom_call.1} parent=1 // pred_check_branch
      %128 = sbr.rel (0) target = $region33
    $region32: #{tpu_custom_call.1} parent=1 // pred_region
      %130 = vsyncadd [#allocation9], 0
      %s131 = sshll.u32 %s15, 4
      %s132 = int_to_ptr.hbm [resolvable:$true] %s131
      %s133 = sshll.u32 [#allocation10], 4
      %s134 = int_to_ptr.vmem [resolvable:$true] %s133
      %139 = dma.hbm_to_vmem [thread:$0]  %s132, 32, %s134, [#allocation9], 16, 16, 1
    $region33: #{tpu_custom_call.1} parent=1 // pred_fallthru
      _
    // Predicated region
    $region34: #{tpu_custom_call.1} parent=1 // pred_check
      _
    $region35: #{tpu_custom_call.1} parent=1 // pred_check_branch
      %141 = sbr.rel (0) target = $region37
    $region36: #{tpu_custom_call.1} parent=1 // pred_region
      %143 = vsyncadd [#allocation12], 0
      %s144 = sshll.u32 %s17, 4
      %s145 = int_to_ptr.hbm [resolvable:$true] %s144
      %s146 = sshll.u32 [#allocation11], 4
      %s147 = int_to_ptr.vmem [resolvable:$true] %s146
      %152 = dma.hbm_to_vmem [thread:$0]  %s145, 32, %s147, [#allocation12], 16, 16, 1
    $region37: #{tpu_custom_call.1} parent=1 // pred_fallthru
      _
    // Predicated region
    $region38: #{tpu_custom_call.1} parent=1 // pred_check
      _
    $region39: #{tpu_custom_call.1} parent=1 // pred_check_branch
      %154 = sbr.rel (0) target = $region41
    $region40: #{tpu_custom_call.1} parent=1 // pred_region
      _
    $region41: #{tpu_custom_call.1} parent=1 // pred_fallthru
      _
    // Predicated region
    $region42: #{tpu_custom_call.1} parent=1 // pred_check
      _
    $region43: #{tpu_custom_call.1} parent=1 // pred_check_branch
      %156 = sbr.rel (0) target = $region45
    $region44: #{tpu_custom_call.1} parent=1 // pred_region
      %158 = vsyncadd [#allocation12], 0
      %s159 = sshll.u32 %s21, 4
      %s160 = int_to_ptr.hbm [resolvable:$true] %s159
      %s161 = sshll.u32 [#allocation13], 4
      %s162 = int_to_ptr.vmem [resolvable:$true] %s161
      %167 = dma.hbm_to_vmem [thread:$0]  %s160, 32, %s162, [#allocation12], 16, 16, 1
    $region45: #{tpu_custom_call.1} parent=1 // pred_fallthru
      _
    // Predicated region
    $region46: #{tpu_custom_call.1} parent=1 // pred_check
      _
    $region47: #{tpu_custom_call.1} parent=1 // pred_check_branch
      %169 = sbr.rel (0) target = $region49
    $region48: #{tpu_custom_call.1} parent=1 // pred_region
      _
    $region49: #{tpu_custom_call.1} parent=1 // pred_fallthru
      _
    // Predicated region
    $region50: #{tpu_custom_call.1} parent=1 // pred_check
      _
    $region51: #{tpu_custom_call.1} parent=1 // pred_check_branch
      %171 = sbr.rel (0) target = $region53
    $region52: #{tpu_custom_call.1} parent=1 // pred_region
      %173 = vsyncadd [#allocation15], 0
      %s174 = sshll.u32 %s25, 4
      %s175 = int_to_ptr.hbm [resolvable:$true] %s174
      %s176 = sshll.u32 [#allocation14], 4
      %s177 = int_to_ptr.vmem [resolvable:$true] %s176
      %182 = dma.hbm_to_vmem [thread:$0]  %s175, 32, %s177, [#allocation15], 16, 16, 1
    $region53: #{tpu_custom_call.1} parent=1 // pred_fallthru
      _
    // Predicated region
    $region54: #{tpu_custom_call.1} parent=1 // pred_check
      _
    $region55: #{tpu_custom_call.1} parent=1 // pred_check_branch
      %184 = sbr.rel (0) target = $region57
    $region56: #{tpu_custom_call.1} parent=1 // pred_region
      %186 = vsyncadd [#allocation15], 0
      %s187 = sshll.u32 %s27, 4
      %s188 = int_to_ptr.hbm [resolvable:$true] %s187
      %s189 = sshll.u32 [#allocation16], 4
      %s190 = int_to_ptr.vmem [resolvable:$true] %s189
      %195 = dma.hbm_to_vmem [thread:$0]  %s188, 256, %s190, [#allocation15], 64, 64, 4
    $region57: #{tpu_custom_call.1} parent=1 // pred_fallthru
      _
    // Predicated region
    $region58: #{tpu_custom_call.1} parent=1 // pred_check
      _
    $region59: #{tpu_custom_call.1} parent=1 // pred_check_branch
      %197 = sbr.rel (0) target = $region61
    $region60: #{tpu_custom_call.1} parent=1 // pred_region
      %199 = vsyncadd [#allocation18], 0
      %s200 = sshll.u32 %s29, 4
      %s201 = int_to_ptr.hbm [resolvable:$true] %s200
      %s202 = sshll.u32 [#allocation17], 4
      %s203 = int_to_ptr.vmem [resolvable:$true] %s202
      %208 = dma.hbm_to_vmem [thread:$0]  %s201, 32, %s203, [#allocation18], 16, 16, 1
    $region61: #{tpu_custom_call.1} parent=1 // pred_fallthru
      _
    // Predicated region
    $region62: #{tpu_custom_call.1} parent=1 // pred_check
      _
    $region63: #{tpu_custom_call.1} parent=1 // pred_check_branch
      %210 = sbr.rel (0) target = $region65
    $region64: #{tpu_custom_call.1} parent=1 // pred_region
      _
    $region65: #{tpu_custom_call.1} parent=1 // pred_fallthru
      _
    // Predicated region
    $region66: #{tpu_custom_call.1} parent=1 // pred_check
      _
    $region67: #{tpu_custom_call.1} parent=1 // pred_check_branch
      %212 = sbr.rel (0) target = $region69
    $region68: #{tpu_custom_call.1} parent=1 // pred_region
      _
    $region69: #{tpu_custom_call.1} parent=1 // pred_fallthru
      _
    // Predicated region
    $region70: #{tpu_custom_call.1} parent=1 // pred_check
      _
    $region71: #{tpu_custom_call.1} parent=1 // pred_check_branch
      %214 = sbr.rel (0) target = $region73
    $region72: #{tpu_custom_call.1} parent=1 // pred_region
      _
    $region73: #{tpu_custom_call.1} parent=1 // pred_fallthru
      _
    // Predicated region
    $region74: #{tpu_custom_call.1} parent=1 // pred_check
      _
    $region75: #{tpu_custom_call.1} parent=1 // pred_check_branch
      %216 = sbr.rel (0) target = $region77
    $region76: #{tpu_custom_call.1} parent=1 // pred_region
      %218 = vsyncadd [#allocation18], 0
      %s219 = sshll.u32 %s37, 4
      %s220 = int_to_ptr.hbm [resolvable:$true] %s219
      %s221 = sshll.u32 [#allocation19], 4
      %s222 = int_to_ptr.vmem [resolvable:$true] %s221
      %227 = dma.hbm_to_vmem [thread:$0]  %s220, 32, %s222, [#allocation18], 16, 16, 1
    $region77: #{tpu_custom_call.1} parent=1 // pred_fallthru
      _
    // Predicated region
    $region78: #{tpu_custom_call.1} parent=1 // pred_check
      _
    $region79: #{tpu_custom_call.1} parent=1 // pred_check_branch
      %229 = sbr.rel (0) target = $region81
    $region80: #{tpu_custom_call.1} parent=1 // pred_region
      %231 = vsyncadd [#allocation21], 0
      %s232 = sshll.u32 %s39, 4
      %s233 = int_to_ptr.hbm [resolvable:$true] %s232
      %s234 = sshll.u32 [#allocation20], 4
      %s235 = int_to_ptr.vmem [resolvable:$true] %s234
      %240 = dma.hbm_to_vmem [thread:$0]  %s233, 512, %s235, [#allocation21], 64, 64, 4
    $region81: #{tpu_custom_call.1} parent=1 // pred_fallthru
      _
    // Predicated region
    $region82: #{tpu_custom_call.1} parent=1 // pred_check
      _
    $region83: #{tpu_custom_call.1} parent=1 // pred_check_branch
      %242 = sbr.rel (0) target = $region85
    $region84: #{tpu_custom_call.1} parent=1 // pred_region
      %244 = vsyncadd [#allocation21], 0
      %s245 = sshll.u32 %s41, 4
      %s246 = int_to_ptr.hbm [resolvable:$true] %s245
      %s247 = sshll.u32 [#allocation22], 4
      %s248 = int_to_ptr.vmem [resolvable:$true] %s247
      %253 = dma.hbm_to_vmem [thread:$0]  %s246, 32, %s248, [#allocation21], 16, 16, 1
    $region85: #{tpu_custom_call.1} parent=1 // pred_fallthru
      _
    // Predicated region
    $region86: #{tpu_custom_call.1} parent=1 // pred_check
      _
    $region87: #{tpu_custom_call.1} parent=1 // pred_check_branch
      %255 = sbr.rel (0) target = $region89
    $region88: #{tpu_custom_call.1} parent=1 // pred_region
      _
    $region89: #{tpu_custom_call.1} parent=1 // pred_fallthru
      _
    // Predicated region
    $region90: #{tpu_custom_call.1} parent=1 // pred_check
      _
    $region91: #{tpu_custom_call.1} parent=1 // pred_check_branch
      %257 = sbr.rel (0) target = $region93
    $region92: #{tpu_custom_call.1} parent=1 // pred_region
      _
    $region93: #{tpu_custom_call.1} parent=1 // pred_fallthru
      _
    // Predicated region
    $region94: #{tpu_custom_call.1} parent=1 // pred_check
      _
    $region95: #{tpu_custom_call.1} parent=1 // pred_check_branch
      %259 = sbr.rel (0) target = $region97
    $region96: #{tpu_custom_call.1} parent=1 // pred_region
      %261 = vsyncadd [#allocation24], 0
      %s262 = sshll.u32 %s47, 4
      %s263 = int_to_ptr.hbm [resolvable:$true] %s262
      %s264 = sshll.u32 [#allocation23], 4
      %s265 = int_to_ptr.vmem [resolvable:$true] %s264
      %270 = dma.hbm_to_vmem [thread:$0]  %s263, 256, %s265, [#allocation24], 64, 64, 4
    $region97: #{tpu_custom_call.1} parent=1 // pred_fallthru
      _
    // Predicated region
    $region98: #{tpu_custom_call.1} parent=1 // pred_check
      _
    $region99: #{tpu_custom_call.1} parent=1 // pred_check_branch
      %272 = sbr.rel (0) target = $region101
    $region100: #{tpu_custom_call.1} parent=1 // pred_region
      %274 = vsyncadd [#allocation24], 0
      %s275 = sshll.u32 %s49, 4
      %s276 = int_to_ptr.hbm [resolvable:$true] %s275
      %s277 = sshll.u32 [#allocation25], 4
      %s278 = int_to_ptr.vmem [resolvable:$true] %s277
      %283 = dma.hbm_to_vmem [thread:$0]  %s276, 256, %s278, [#allocation24], 64, 64, 4
    $region101: #{tpu_custom_call.1} parent=1 // pred_fallthru
      _
    // Predicated region
    $region102: #{tpu_custom_call.1} parent=1 // pred_check
      _
    $region103: #{tpu_custom_call.1} parent=1 // pred_check_branch
      %285 = sbr.rel (0) target = $region105
    $region104: #{tpu_custom_call.1} parent=1 // pred_region
      _
    $region105: #{tpu_custom_call.1} parent=1 // pred_fallthru
      _
    // Predicated region
    $region106: #{tpu_custom_call.1} parent=1 // pred_check
      _
    $region107: #{tpu_custom_call.1} parent=1 // pred_check_branch
      %287 = sbr.rel (0) target = $region109
    $region108: #{tpu_custom_call.1} parent=1 // pred_region
      %289 = vsyncadd [#allocation27], 0
      %s290 = sshll.u32 %s53, 4
      %s291 = int_to_ptr.hbm [resolvable:$true] %s290
      %s292 = sshll.u32 [#allocation26], 4
      %s293 = int_to_ptr.vmem [resolvable:$true] %s292
      %298 = dma.hbm_to_vmem [thread:$0]  %s291, 256, %s293, [#allocation27], 64, 64, 4
    $region109: #{tpu_custom_call.1} parent=1 // pred_fallthru
      _
    // Predicated region
    $region110: #{tpu_custom_call.1} parent=1 // pred_check
      _
    $region111: #{tpu_custom_call.1} parent=1 // pred_check_branch
      %300 = sbr.rel (0) target = $region113
    $region112: #{tpu_custom_call.1} parent=1 // pred_region
      _
    $region113: #{tpu_custom_call.1} parent=1 // pred_fallthru
      _
    // Predicated region
    $region114: #{tpu_custom_call.1} parent=1 // pred_check
      _
    $region115: #{tpu_custom_call.1} parent=1 // pred_check_branch
      %302 = sbr.rel (0) target = $region117
    $region116: #{tpu_custom_call.1} parent=1 // pred_region
      %304 = dma.done [#allocation3], 128
    $region117: #{tpu_custom_call.1} parent=1 // pred_fallthru
      _
    // Predicated region
    $region118: #{tpu_custom_call.1} parent=1 // pred_check
      _
    $region119: #{tpu_custom_call.1} parent=1 // pred_check_branch
      %306 = sbr.rel (0) target = $region121
    $region120: #{tpu_custom_call.1} parent=1 // pred_region
      %308 = dma.done [#allocation6], 256
    $region121: #{tpu_custom_call.1} parent=1 // pred_fallthru
      _
    // Predicated region
    $region122: #{tpu_custom_call.1} parent=1 // pred_check
      _
    $region123: #{tpu_custom_call.1} parent=1 // pred_check_branch
      %310 = sbr.rel (0) target = $region125
    $region124: #{tpu_custom_call.1} parent=1 // pred_region
      %312 = dma.done [#allocation6], 64
    $region125: #{tpu_custom_call.1} parent=1 // pred_fallthru
      _
    // Predicated region
    $region126: #{tpu_custom_call.1} parent=1 // pred_check
      _
    $region127: #{tpu_custom_call.1} parent=1 // pred_check_branch
      %314 = sbr.rel (0) target = $region129
    $region128: #{tpu_custom_call.1} parent=1 // pred_region
      %316 = dma.done [#allocation9], 16
    $region129: #{tpu_custom_call.1} parent=1 // pred_fallthru
      _
    // Predicated region
    $region130: #{tpu_custom_call.1} parent=1 // pred_check
      _
    $region131: #{tpu_custom_call.1} parent=1 // pred_check_branch
      %318 = sbr.rel (0) target = $region133
    $region132: #{tpu_custom_call.1} parent=1 // pred_region
      %320 = dma.done [#allocation9], 32
    $region133: #{tpu_custom_call.1} parent=1 // pred_fallthru
      _
    // Predicated region
    $region134: #{tpu_custom_call.1} parent=1 // pred_check
      _
    $region135: #{tpu_custom_call.1} parent=1 // pred_check_branch
      %322 = sbr.rel (0) target = $region137
    $region136: #{tpu_custom_call.1} parent=1 // pred_region
      %324 = dma.done [#allocation12], 32
    $region137: #{tpu_custom_call.1} parent=1 // pred_fallthru
      _
    // Predicated region
    $region138: #{tpu_custom_call.1} parent=1 // pred_check
      _
    $region139: #{tpu_custom_call.1} parent=1 // pred_check_branch
      %326 = sbr.rel (0) target = $region141
    $region140: #{tpu_custom_call.1} parent=1 // pred_region
      %328 = dma.done [#allocation12], 32
    $region141: #{tpu_custom_call.1} parent=1 // pred_fallthru
      _
    // Predicated region
    $region142: #{tpu_custom_call.1} parent=1 // pred_check
      _
    $region143: #{tpu_custom_call.1} parent=1 // pred_check_branch
      %330 = sbr.rel (0) target = $region145
    $region144: #{tpu_custom_call.1} parent=1 // pred_region
      %332 = dma.done [#allocation15], 32
    $region145: #{tpu_custom_call.1} parent=1 // pred_fallthru
      _
    // Predicated region
    $region146: #{tpu_custom_call.1} parent=1 // pred_check
      _
    $region147: #{tpu_custom_call.1} parent=1 // pred_check_branch
      %334 = sbr.rel (0) target = $region149
    $region148: #{tpu_custom_call.1} parent=1 // pred_region
      %336 = dma.done [#allocation15], 256
    $region149: #{tpu_custom_call.1} parent=1 // pred_fallthru
      _
    // Predicated region
    $region150: #{tpu_custom_call.1} parent=1 // pred_check
      _
    $region151: #{tpu_custom_call.1} parent=1 // pred_check_branch
      %338 = sbr.rel (0) target = $region153
    $region152: #{tpu_custom_call.1} parent=1 // pred_region
      %340 = dma.done [#allocation18], 32
    $region153: #{tpu_custom_call.1} parent=1 // pred_fallthru
      _
    // Predicated region
    $region154: #{tpu_custom_call.1} parent=1 // pred_check
      _
    $region155: #{tpu_custom_call.1} parent=1 // pred_check_branch
      %342 = sbr.rel (0) target = $region157
    $region156: #{tpu_custom_call.1} parent=1 // pred_region
      %344 = dma.done [#allocation18], 32
    $region157: #{tpu_custom_call.1} parent=1 // pred_fallthru
      _
    // Predicated region
    $region158: #{tpu_custom_call.1} parent=1 // pred_check
      _
    $region159: #{tpu_custom_call.1} parent=1 // pred_check_branch
      %346 = sbr.rel (0) target = $region161
    $region160: #{tpu_custom_call.1} parent=1 // pred_region
      %348 = dma.done [#allocation21], 512
    $region161: #{tpu_custom_call.1} parent=1 // pred_fallthru
      _
    // Predicated region
    $region162: #{tpu_custom_call.1} parent=1 // pred_check
      _
    $region163: #{tpu_custom_call.1} parent=1 // pred_check_branch
      %350 = sbr.rel (0) target = $region165
    $region164: #{tpu_custom_call.1} parent=1 // pred_region
      %352 = dma.done [#allocation21], 32
    $region165: #{tpu_custom_call.1} parent=1 // pred_fallthru
      _
    // Predicated region
    $region166: #{tpu_custom_call.1} parent=1 // pred_check
      _
    $region167: #{tpu_custom_call.1} parent=1 // pred_check_branch
      %354 = sbr.rel (0) target = $region169
    $region168: #{tpu_custom_call.1} parent=1 // pred_region
      %356 = dma.done [#allocation24], 256
    $region169: #{tpu_custom_call.1} parent=1 // pred_fallthru
      _
    // Predicated region
    $region170: #{tpu_custom_call.1} parent=1 // pred_check
      _
    $region171: #{tpu_custom_call.1} parent=1 // pred_check_branch
      %358 = sbr.rel (0) target = $region173
    $region172: #{tpu_custom_call.1} parent=1 // pred_region
      %360 = dma.done [#allocation24], 256
    $region173: #{tpu_custom_call.1} parent=1 // pred_fallthru
      _
    // Predicated region
    $region174: #{tpu_custom_call.1} parent=1 // pred_check
      _
    $region175: #{tpu_custom_call.1} parent=1 // pred_check_branch
      %362 = sbr.rel (0) target = $region177
    $region176: #{tpu_custom_call.1} parent=1 // pred_region
      %364 = dma.done [#allocation27], 256
    $region177: #{tpu_custom_call.1} parent=1 // pred_fallthru
      _
    %v366 = vld [vmem:[#allocation5] sm:$0xff]
    %v367 = vld [vmem:[#allocation5 + $0x8] sm:$0xff]
    %v368 = vld [vmem:[%s5] sm:$0xff]
    %v369 = vld [vmem:[%s5 + $0x8] sm:$0xff]
    %v370 = vld [vmem:[%s5 + $0x10] sm:$0xff]
    %v371 = vld [vmem:[%s5 + $0x18] sm:$0xff]
    %v372 = vld [vmem:[%s5 + $0x20] sm:$0xff]
    %v373 = vld [vmem:[%s5 + $0x28] sm:$0xff]
    %v374 = vld [vmem:[%s7] sm:$0xf]
    %v375 = vld [vmem:[%s7 + $0x4] sm:$0xf]
    %v376 = vld [vmem:[#allocation7] sm:$0xf]
    %v377 = vld [vmem:[#allocation2] sm:$0xff]
    %v378 = vld [vmem:[%s11] sm:$0xf]
    %v379 = vld [vmem:[%s11 + $0x4] sm:$0xf]
    %v380 = vld [vmem:[%s11 + $0x8] sm:$0xf]
    %v381 = vld [vmem:[%s11 + $0xc] sm:$0xf]
    %v382 = vld [vmem:[%s11 + $0x10] sm:$0xf]
    %v383 = vld [vmem:[%s11 + $0x14] sm:$0xf]
    %v384 = vld [vmem:[%s11 + $0x18] sm:$0xf]
    %v385 = vld [vmem:[%s11 + $0x1c] sm:$0xf]
    %v386 = vpack.c.bf16 %v377, %v377
    %v387 = vld [vmem:[#allocation8] sm:$0x1]
    %v389 = vperm.slane %v387, 0
    %v399 = vunpack.c.l.b16 %v378
    %v400 = vunpack.c.l.b16 %v379
    %v401 = vunpack.c.l.b16 %v380
    %v402 = vunpack.c.l.b16 %v381
    %v403 = vunpack.c.l.b16 %v382
    %v404 = vunpack.c.l.b16 %v383
    %v405 = vunpack.c.l.b16 %v384
    %v406 = vunpack.c.l.b16 %v385
    %v407 = vpack.c.b16 %v400, %v399
    %v408 = vpack.c.b16 %v402, %v401
    %v409 = vpack.c.b16 %v404, %v403
    %v410 = vpack.c.b16 %v406, %v405
    %vm415 = vcmask 523264
    %v417 = vsel %vm415, %v386, 0
    %419 = vmatpush.bf16.msra.mxu0 0
    %420 = vmatpush.bf16.msra.mxu0 0
    %421 = vmatpush.bf16.msra.mxu0 0
    %422 = vmatpush.bf16.msra.mxu0 0
    %423 = vmatpush.bf16.msra.mxu0 %v410
    %424 = vmatpush.bf16.msra.mxu0 %v409
    %425 = vmatpush.bf16.msra.mxu0 %v408
    %426 = vmatpush.bf16.msra.mxu0 %v407
    %427 = vmatmul.bf16.gmra.mxu0 %v417
    %v428 = vpop.f32.mrf.mxu0
    %v429 = vadd.f32 %v389, %v428
    %v430 = vpop.f32.mrf.mxu0
    %431 = vdwg.mxu0
    %vm432 = vcmask 261120
    %v433 = vsel %vm432, %v429, 0.0
    %434 = vadd.xlane.f32.xlu0 %v433
    %v435 = vpop.xlane.xlu0 %434
    %v436 = vrcp.pop 32.0
    %v437 = vmul.f32 32.0, %v436
    %v438 = vsub.f32 1.0, %v437
    %v439 = vmul.f32 %v436, %v438
    %v440 = vadd.f32 %v436, %v439
    %vm441 = vweird.f32 %v436
    %v442 = vsel %vm441, %v436, %v440
    %v443 = vmul.f32 %v435, %v442
    %v444 = vsub.f32 %v429, %v443
    %v445 = vmul.f32 %v444, %v444
    %v446 = vsel %vm432, %v445, 0.0
    %447 = vadd.xlane.f32.xlu0 %v446
    %v448 = vpop.xlane.xlu0 %447
    %v449 = vmul.f32 %v448, %v442
    %v450 = vadd.f32 %v449, 1e-05
    %v451 = vrsqrt.pop %v450
    %v452 = vmul.f32 %v451, %v450
    %v453 = vmul.f32 %v452, %v451
    %v454 = vmul.f32 0.5, %v453
    %v455 = vsub.f32 1.5, %v454
    %v456 = vmul.f32 %v451, %v455
    %vm457 = vweird.f32 %v450
    %vm458 = vweird.f32 %v451
    %vm459 = vmor %vm457, %vm458
    %v460 = vsel %vm459, %v451, %v456
    %v461 = vmul.f32 %v444, %v460
    %v462 = vld [vmem:[#allocation10] sm:$0x1]
    %v464 = vperm.slane %v462, 0
    %v466 = vmul.f32 %v461, %v464
    %v467 = vld [vmem:[#allocation11] sm:$0x1]
    %v469 = vperm.slane %v467, 0
    %v471 = vadd.f32 %v466, %v469
    %v472 = vld [vmem:[%s19] sm:$0xf]
    %v473 = vld [vmem:[%s19 + $0x4] sm:$0xf]
    %v474 = vld [vmem:[%s19 + $0x8] sm:$0xf]
    %v475 = vld [vmem:[%s19 + $0xc] sm:$0xf]
    %v476 = vpack.c.bf16 %v471, %v471
    %v477 = vld [vmem:[#allocation13] sm:$0x1]
    %v479 = vperm.slane %v477, 0
    %v485 = vunpack.c.l.b16 %v472
    %v486 = vunpack.c.l.b16 %v473
    %v487 = vunpack.c.l.b16 %v474
    %v488 = vunpack.c.l.b16 %v475
    %v489 = vpack.c.b16 %v486, %v485
    %v490 = vpack.c.b16 %v488, %v487
    %v494 = vsel %vm432, %v476, 0
    %496 = vmatpush.bf16.msra.mxu0 0
    %497 = vmatpush.bf16.msra.mxu0 0
    %498 = vmatpush.bf16.msra.mxu0 0
    %499 = vmatpush.bf16.msra.mxu0 0
    %500 = vmatpush.bf16.msra.mxu0 0
    %501 = vmatpush.bf16.msra.mxu0 0
    %502 = vmatpush.bf16.msra.mxu0 %v490
    %503 = vmatpush.bf16.msra.mxu0 %v489
    %504 = vmatmul.bf16.gmra.mxu0 %v494
    %v505 = vpop.f32.mrf.mxu0
    %v506 = vadd.f32 %v479, %v505
    %v507 = vpop.f32.mrf.mxu0
    %508 = vdwg.mxu0
    %v509 = vxor.u32 %v506, 2147483648
    %v510 = vmul.f32 %v509, 1.442695
    %v511 = vpow.pop %v510
    %v512 = vadd.f32 %v511, 1.0
    %v513 = vrcp.pop %v512
    %v514 = vmul.f32 %v512, %v513
    %v515 = vsub.f32 1.0, %v514
    %v516 = vmul.f32 %v513, %v515
    %v517 = vadd.f32 %v513, %v516
    %vm518 = vweird.f32 %v512
    %vm519 = vweird.f32 %v513
    %vm520 = vmor %vm518, %vm519
    %v521 = vsel %vm520, %v513, %v517
    %v522 = vand.u32 2147483647, %v512
    %vm523 = vcmp.eq.f32.partialorder %v522, 8.507059e+37
    %v524 = vand.u32 %v512, 2147483648
    %v525 = vor.u32 1.1754944e-38, %v524
    %v526 = vsel %vm523, %v525, %v521
    %v527 = vmul.f32 1.0, %v526
    %v528 = vmul.f32 %v506, %v527
    %v529 = vmul.f32 %v528, 1.6666666
    %v530 = vld [vmem:[%s23] sm:$0xf]
    %v531 = vld [vmem:[%s23 + $0x4] sm:$0xf]
    %v532 = vld [vmem:[%s23 + $0x8] sm:$0xf]
    %v533 = vld [vmem:[%s23 + $0xc] sm:$0xf]
    %v534 = vpack.c.bf16 %v529, %v529
    %v535 = vld [vmem:[#allocation14] sm:$0x1]
    %v537 = vperm.slane %v535, 0
    %v543 = vunpack.c.l.b16 %v530
    %v544 = vunpack.c.l.b16 %v531
    %v545 = vunpack.c.l.b16 %v532
    %v546 = vunpack.c.l.b16 %v533
    %v547 = vpack.c.b16 %v544, %v543
    %v548 = vpack.c.b16 %v546, %v545
    %v552 = vsel %vm432, %v534, 0
    %554 = vmatpush.bf16.msra.mxu0 0
    %555 = vmatpush.bf16.msra.mxu0 0
    %556 = vmatpush.bf16.msra.mxu0 0
    %557 = vmatpush.bf16.msra.mxu0 0
    %558 = vmatpush.bf16.msra.mxu0 0
    %559 = vmatpush.bf16.msra.mxu0 0
    %560 = vmatpush.bf16.msra.mxu0 %v548
    %561 = vmatpush.bf16.msra.mxu0 %v547
    %562 = vmatmul.bf16.gmra.mxu0 %v552
    %v563 = vpop.f32.mrf.mxu0
    %v564 = vadd.f32 %v537, %v563
    %v565 = vpop.f32.mrf.mxu0
    %566 = vdwg.mxu0
    %v567 = vld [vmem:[#allocation16] sm:$0xf]
    %v568 = vld [vmem:[#allocation16 + $0x4] sm:$0xf]
    %v569 = vpack.c.bf16 %v367, %v366
    %v570 = vld [vmem:[#allocation17] sm:$0x1]
    %v572 = vperm.slane %v570, 0
    %v576 = vunpack.c.l.b16 %v567
    %v577 = vunpack.c.l.b16 %v568
    %v578 = vpack.c.b16 %v577, %v576
    %vm580 = vcmask 130048
    %v582 = vsel %vm580, %v569, 0
    %584 = vmatpush.bf16.msra.mxu0 0
    %585 = vmatpush.bf16.msra.mxu0 0
    %586 = vmatpush.bf16.msra.mxu0 0
    %587 = vmatpush.bf16.msra.mxu0 0
    %588 = vmatpush.bf16.msra.mxu0 0
    %589 = vmatpush.bf16.msra.mxu0 0
    %590 = vmatpush.bf16.msra.mxu0 0
    %591 = vmatpush.bf16.msra.mxu0 %v578
    %592 = vmatmul.bf16.gmra.mxu0 %v582
    %v593 = vpop.f32.mrf.mxu0
    %v594 = vadd.f32 %v572, %v593
    %v595 = vpop.f32.mrf.mxu0
    %v596 = vadd.f32 %v572, %v595
    %597 = vdwg.mxu0
    %v598 = vpack.c.bf16 %v564, %v564
    %v601 = vunpack.c.l.b16 %v374
    %v602 = vunpack.c.l.b16 %v375
    %v603 = vpack.c.b16 %v602, %v601
    %vm604 = vcmask 64512
    %v606 = vsel %vm604, %v603, 0
    %vm608 = vcmask 1043456
    %v610 = vsel %vm608, %v598, 0
    %612 = vmatpush.bf16.msra.mxu0 0
    %613 = vmatpush.bf16.msra.mxu0 0
    %614 = vmatpush.bf16.msra.mxu0 0
    %615 = vmatpush.bf16.msra.mxu0 0
    %616 = vmatpush.bf16.msra.mxu0 0
    %617 = vmatpush.bf16.msra.mxu0 0
    %618 = vmatpush.bf16.msra.mxu0 0
    %619 = vmatpush.bf16.msra.mxu0 %v610
    %620 = vmatmul.bf16.gmra.mxu0 %v606
    %v621 = vpop.f32.mrf.mxu0
    %v622 = vadd.f32 0.0, %v621
    %v623 = vpop.f32.mrf.mxu0
    %v624 = vadd.f32 0.0, %v623
    %625 = vdwg.mxu0
    %v627 = vsel %vm608, 0, 0
    %629 = vmatpush.bf16.msra.mxu0 0
    %630 = vmatpush.bf16.msra.mxu0 0
    %631 = vmatpush.bf16.msra.mxu0 0
    %632 = vmatpush.bf16.msra.mxu0 0
    %633 = vmatpush.bf16.msra.mxu0 0
    %634 = vmatpush.bf16.msra.mxu0 0
    %635 = vmatpush.bf16.msra.mxu0 0
    %636 = vmatpush.bf16.msra.mxu0 %v627
    %637 = vmatmul.bf16.gmra.mxu0 %v606
    %v638 = vpop.f32.mrf.mxu0
    %v639 = vadd.f32 0.0, %v638
    %v640 = vpop.f32.mrf.mxu0
    %v641 = vadd.f32 0.0, %v640
    %642 = vdwg.mxu0
    %v643 = vmul.f32 %v622, %v594
    %v644 = vmul.f32 %v624, %v596
    %v645 = vmul.f32 %v643, 0.57735026
    %v646 = vmul.f32 %v644, 0.57735026
    %v647 = vpack.c.bf16 %v644, %v643
    %v649 = vsel %vm580, %v376, 0
    %651 = vmatpush.bf16.msra.mxu0 0
    %652 = vmatpush.bf16.msra.mxu0 0
    %653 = vmatpush.bf16.msra.mxu0 0
    %654 = vmatpush.bf16.msra.mxu0 0
    %655 = vmatpush.bf16.msra.mxu0 0
    %656 = vmatpush.bf16.msra.mxu0 0
    %657 = vmatpush.bf16.msra.mxu0 0
    %658 = vmatpush.bf16.msra.mxu0 %v647
    %659 = vmatmul.bf16.gmra.mxu0 %v649
    %v660 = vpop.f32.mrf.mxu0
    %v661 = vadd.f32 0.0, %v660
    %v662 = vpop.f32.mrf.mxu0
    %663 = vdwg.mxu0
    %v664 = vadd.f32 %v429, %v661
    %v665 = vmul.f32 %v664, 0.70710677
    %668 = vrot.lane.b32.xlu0 %v645, 96
    %v669 = vpop.permute.xlu0 %668
    %670 = vrot.lane.b32.xlu0 %v646, 96
    %v671 = vpop.permute.xlu0 %670
    %v674 = vmul.f32 %v639, %v669
    %v675 = vmul.f32 %v641, %v671
    %678 = vrot.lane.b32.xlu0 %v368, 64
    %v679 = vpop.permute.xlu0 %678
    %680 = vrot.lane.b32.xlu0 %v369, 64
    %v681 = vpop.permute.xlu0 %680
    %v684 = vmul.f32 %v643, %v679
    %v685 = vmul.f32 %v644, %v681
    %688 = vrot.lane.b32.xlu0 %v684, 64
    %v689 = vpop.permute.xlu0 %688
    %690 = vrot.lane.b32.xlu0 %v685, 64
    %v691 = vpop.permute.xlu0 %690
    %v694 = vadd.f32 %v674, %v689
    %v695 = vadd.f32 %v675, %v691
    %v696 = vmul.f32 %v694, 0.17677669
    %v697 = vmul.f32 %v695, 0.17677669
    %v698 = vpack.c.bf16 %v697, %v696
    %699 = vmatpush.bf16.msra.mxu0 0
    %700 = vmatpush.bf16.msra.mxu0 0
    %701 = vmatpush.bf16.msra.mxu0 0
    %702 = vmatpush.bf16.msra.mxu0 0
    %703 = vmatpush.bf16.msra.mxu0 0
    %704 = vmatpush.bf16.msra.mxu0 0
    %705 = vmatpush.bf16.msra.mxu0 0
    %706 = vmatpush.bf16.msra.mxu0 %v698
    %707 = vmatmul.bf16.gmra.mxu0 %v649
    %v708 = vpop.f32.mrf.mxu0
    %v709 = vadd.f32 0.0, %v708
    %v710 = vpop.f32.mrf.mxu0
    %711 = vdwg.mxu0
    %714 = vrot.lane.b32.xlu0 %v370, 64
    %v715 = vpop.permute.xlu0 %714
    %716 = vrot.lane.b32.xlu0 %v371, 64
    %v717 = vpop.permute.xlu0 %716
    %v720 = vmul.f32 %v643, %v715
    %v721 = vmul.f32 %v644, %v717
    %724 = vrot.lane.b32.xlu0 %v720, 64
    %v725 = vpop.permute.xlu0 %724
    %726 = vrot.lane.b32.xlu0 %v721, 64
    %v727 = vpop.permute.xlu0 %726
    %v730 = vadd.f32 %v674, %v725
    %v731 = vadd.f32 %v675, %v727
    %v732 = vmul.f32 %v730, 0.17677669
    %v733 = vmul.f32 %v731, 0.17677669
    %v734 = vpack.c.bf16 %v733, %v732
    %735 = vmatpush.bf16.msra.mxu0 0
    %736 = vmatpush.bf16.msra.mxu0 0
    %737 = vmatpush.bf16.msra.mxu0 0
    %738 = vmatpush.bf16.msra.mxu0 0
    %739 = vmatpush.bf16.msra.mxu0 0
    %740 = vmatpush.bf16.msra.mxu0 0
    %741 = vmatpush.bf16.msra.mxu0 0
    %742 = vmatpush.bf16.msra.mxu0 %v734
    %743 = vmatmul.bf16.gmra.mxu0 %v649
    %v744 = vpop.f32.mrf.mxu0
    %v745 = vadd.f32 0.0, %v744
    %v746 = vpop.f32.mrf.mxu0
    %747 = vdwg.mxu0
    %750 = vrot.lane.b32.xlu0 %v372, 64
    %v751 = vpop.permute.xlu0 %750
    %752 = vrot.lane.b32.xlu0 %v373, 64
    %v753 = vpop.permute.xlu0 %752
    %v756 = vmul.f32 %v643, %v751
    %v757 = vmul.f32 %v644, %v753
    %760 = vrot.lane.b32.xlu0 %v756, 64
    %v761 = vpop.permute.xlu0 %760
    %762 = vrot.lane.b32.xlu0 %v757, 64
    %v763 = vpop.permute.xlu0 %762
    %v766 = vadd.f32 %v674, %v761
    %v767 = vadd.f32 %v675, %v763
    %v768 = vmul.f32 %v766, 0.17677669
    %v769 = vmul.f32 %v767, 0.17677669
    %v770 = vpack.c.bf16 %v769, %v768
    %771 = vmatpush.bf16.msra.mxu0 0
    %772 = vmatpush.bf16.msra.mxu0 0
    %773 = vmatpush.bf16.msra.mxu0 0
    %774 = vmatpush.bf16.msra.mxu0 0
    %775 = vmatpush.bf16.msra.mxu0 0
    %776 = vmatpush.bf16.msra.mxu0 0
    %777 = vmatpush.bf16.msra.mxu0 0
    %778 = vmatpush.bf16.msra.mxu0 %v770
    %779 = vmatmul.bf16.gmra.mxu0 %v649
    %v780 = vpop.f32.mrf.mxu0
    %v781 = vadd.f32 0.0, %v780
    %v782 = vpop.f32.mrf.mxu0
    %783 = vdwg.mxu0
    %v784 = vld [vmem:[%s31] sm:$0xf]
    %v785 = vld [vmem:[%s31 + $0x4] sm:$0xf]
    %v786 = vld [vmem:[%s31 + $0x8] sm:$0xf]
    %v787 = vld [vmem:[%s31 + $0xc] sm:$0xf]
    %v788 = vpack.c.bf16 %v745, %v709
    %v789 = vpack.c.bf16 %v781, %v781
    %v794 = vunpack.c.l.b16 %v784
    %v795 = vunpack.c.l.b16 %v785
    %v796 = vunpack.c.l.b16 %v786
    %v797 = vunpack.c.l.b16 %v787
    %v798 = vpack.c.b16 %v795, %v794
    %v799 = vpack.c.b16 %v797, %v796
    %v803 = vsel %vm432, %v788, 0
    %v806 = vsel %vm432, %v789, 0
    %808 = vmatpush.bf16.msra.mxu0 0
    %809 = vmatpush.bf16.msra.mxu0 0
    %810 = vmatpush.bf16.msra.mxu0 0
    %811 = vmatpush.bf16.msra.mxu0 0
    %812 = vmatpush.bf16.msra.mxu0 0
    %813 = vmatpush.bf16.msra.mxu0 0
    %814 = vmatpush.bf16.msra.mxu0 %v799
    %815 = vmatpush.bf16.msra.mxu0 %v798
    %816 = vmatmul.bf16.gmra.mxu0 %v803
    %v817 = vpop.f32.mrf.mxu0
    %v818 = vadd.f32 0.0, %v817
    %v819 = vpop.f32.mrf.mxu0
    %v820 = vadd.f32 0.0, %v819
    %821 = vmatmul.bf16.gmra.mxu0 %v806
    %v822 = vpop.f32.mrf.mxu0
    %v823 = vadd.f32 0.0, %v822
    %v824 = vpop.f32.mrf.mxu0
    %825 = vdwg.mxu0
    %827 = vrot.lane.b32.xlu0 %v818, 96
    %v828 = vpop.permute.xlu0 %827
    %v830 = vmul.f32 %v818, %v828
    %832 = vrot.lane.b32.xlu0 %v820, 96
    %v833 = vpop.permute.xlu0 %832
    %v835 = vmul.f32 %v820, %v833
    %v836 = vadd.f32 %v830, %v835
    %838 = vrot.lane.b32.xlu0 %v823, 96
    %v839 = vpop.permute.xlu0 %838
    %v841 = vmul.f32 %v823, %v839
    %v842 = vadd.f32 %v836, %v841
    %v843 = vmul.f32 %v842, 0.17677669
    %v844 = vmul.f32 %v818, %v818
    %v845 = vmul.f32 %v820, %v820
    %v846 = vadd.f32 %v844, %v845
    %v847 = vmul.f32 %v823, %v823
    %v848 = vadd.f32 %v846, %v847
    %v849 = vadd.f32 %v848, 1e-08
    %v850 = vrsqrt.pop %v849
    %v851 = vmul.f32 %v850, %v849
    %v852 = vmul.f32 %v851, %v850
    %v853 = vmul.f32 0.5, %v852
    %v854 = vsub.f32 1.5, %v853
    %v855 = vmul.f32 %v850, %v854
    %v856 = vmul.f32 %v849, %v855
    %vm857 = vcmp.eq.f32.partialorder %v849, inf
    %v858 = vsel %vm857, %v849, %v856
    %vm859 = vcmp.eq.f32.partialorder %v849, 0.0
    %v860 = vand.u32 %v849, 2147483648
    %v861 = vsel %vm859, %v860, %v858
    %v862 = vld [vmem:[%s33] sm:$0xf]
    %v863 = vld [vmem:[%s33 + $0x4] sm:$0xf]
    %v864 = vld [vmem:[%s33 + $0x8] sm:$0xf]
    %v865 = vld [vmem:[%s33 + $0xc] sm:$0xf]
    %v866 = vpack.c.bf16 %v665, %v665
    %v867 = vld [vmem:[%s35] sm:$0xf]
    %v868 = vld [vmem:[%s35 + $0x4] sm:$0xf]
    %v869 = vld [vmem:[%s35 + $0x8] sm:$0xf]
    %v870 = vld [vmem:[%s35 + $0xc] sm:$0xf]
    %v871 = vpack.c.bf16 %v861, %v861
    %873 = vrot.lane.b32.xlu0 %v871, 96
    %v874 = vpop.permute.xlu0 %873
    %v879 = vunpack.c.l.b16 %v867
    %v880 = vunpack.c.l.b16 %v868
    %v881 = vunpack.c.l.b16 %v869
    %v882 = vunpack.c.l.b16 %v870
    %v883 = vpack.c.b16 %v880, %v879
    %v884 = vpack.c.b16 %v882, %v881
    %v888 = vsel %vm432, %v874, 0
    %890 = vmatpush.bf16.msra.mxu0 0
    %891 = vmatpush.bf16.msra.mxu0 0
    %892 = vmatpush.bf16.msra.mxu0 0
    %893 = vmatpush.bf16.msra.mxu0 0
    %894 = vmatpush.bf16.msra.mxu0 0
    %895 = vmatpush.bf16.msra.mxu0 0
    %896 = vmatpush.bf16.msra.mxu0 %v884
    %897 = vmatpush.bf16.msra.mxu0 %v883
    %898 = vmatmul.bf16.gmra.mxu0 %v888
    %v899 = vpop.f32.mrf.mxu0
    %v900 = vadd.f32 0.0, %v899
    %v901 = vpop.f32.mrf.mxu0
    %902 = vdwg.mxu0
    %v907 = vunpack.c.l.b16 %v862
    %v908 = vunpack.c.l.b16 %v863
    %v909 = vunpack.c.l.b16 %v864
    %v910 = vunpack.c.l.b16 %v865
    %v911 = vpack.c.b16 %v908, %v907
    %v912 = vpack.c.b16 %v910, %v909
    %v916 = vsel %vm432, %v866, 0
    %918 = vmatpush.bf16.msra.mxu0 0
    %919 = vmatpush.bf16.msra.mxu0 0
    %920 = vmatpush.bf16.msra.mxu0 0
    %921 = vmatpush.bf16.msra.mxu0 0
    %922 = vmatpush.bf16.msra.mxu0 0
    %923 = vmatpush.bf16.msra.mxu0 0
    %924 = vmatpush.bf16.msra.mxu0 %v912
    %925 = vmatpush.bf16.msra.mxu0 %v911
    %926 = vmatmul.bf16.gmra.mxu0 %v916
    %v927 = vpop.f32.mrf.mxu0
    %v928 = vadd.f32 %v900, %v927
    %v929 = vpop.f32.mrf.mxu0
    %930 = vdwg.mxu0
    %v931 = vld [vmem:[#allocation19] sm:$0x1]
    %v933 = vperm.slane %v931, 0
    %v935 = vadd.f32 %v928, %v933
    %v936 = vxor.u32 %v935, 2147483648
    %v937 = vmul.f32 %v936, 1.442695
    %v938 = vpow.pop %v937
    %v939 = vadd.f32 %v938, 1.0
    %v940 = vrcp.pop %v939
    %v941 = vmul.f32 %v939, %v940
    %v942 = vsub.f32 1.0, %v941
    %v943 = vmul.f32 %v940, %v942
    %v944 = vadd.f32 %v940, %v943
    %vm945 = vweird.f32 %v939
    %vm946 = vweird.f32 %v940
    %vm947 = vmor %vm945, %vm946
    %v948 = vsel %vm947, %v940, %v944
    %v949 = vand.u32 2147483647, %v939
    %vm950 = vcmp.eq.f32.partialorder %v949, 8.507059e+37
    %v951 = vand.u32 %v939, 2147483648
    %v952 = vor.u32 1.1754944e-38, %v951
    %v953 = vsel %vm950, %v952, %v948
    %v954 = vmul.f32 1.0, %v953
    %v955 = vmul.f32 %v935, %v954
    %v956 = vmul.f32 %v955, 1.6666666
    %v957 = vld [vmem:[#allocation20] sm:$0xf]
    %v958 = vld [vmem:[#allocation20 + $0x4] sm:$0xf]
    %v959 = vld [vmem:[#allocation20 + $0x8] sm:$0xf]
    %v960 = vld [vmem:[#allocation20 + $0xc] sm:$0xf]
    %v961 = vpack.c.bf16 %v956, %v956
    %v962 = vld [vmem:[#allocation22] sm:$0x1]
    %v964 = vperm.slane %v962, 0
    %v970 = vunpack.c.l.b16 %v957
    %v971 = vunpack.c.l.b16 %v958
    %v972 = vunpack.c.l.b16 %v959
    %v973 = vunpack.c.l.b16 %v960
    %v974 = vpack.c.b16 %v971, %v970
    %v975 = vpack.c.b16 %v973, %v972
    %v979 = vsel %vm432, %v961, 0
    %981 = vmatpush.bf16.msra.mxu0 0
    %982 = vmatpush.bf16.msra.mxu0 0
    %983 = vmatpush.bf16.msra.mxu0 0
    %984 = vmatpush.bf16.msra.mxu0 0
    %985 = vmatpush.bf16.msra.mxu0 0
    %986 = vmatpush.bf16.msra.mxu0 0
    %987 = vmatpush.bf16.msra.mxu0 %v975
    %988 = vmatpush.bf16.msra.mxu0 %v974
    %989 = vmatmul.bf16.gmra.mxu0 %v979
    %v990 = vpop.f32.mrf.mxu0
    %v991 = vadd.f32 %v964, %v990
    %v992 = vpop.f32.mrf.mxu0
    %993 = vdwg.mxu0
    %995 = vrot.lane.b32.xlu0 %v843, 32
    %v996 = vpop.permute.xlu0 %995
    %v998 = vmul.f32 %v991, %v996
    %1000 = vrot.lane.b32.xlu0 %v998, 96
    %v1001 = vpop.permute.xlu0 %1000
    %v1003 = vadd.f32 %v991, %v1001
    %v1004 = vmul.f32 %v1003, 0.70710677
    %v1005 = vadd.f32 %v665, %v1004
    %v1006 = vmul.f32 %v1005, 0.70710677
    %1008 = vrot.lane.b32.xlu0 %v991, 64
    %v1009 = vpop.permute.xlu0 %1008
    %v1011 = vmul.f32 %v818, %v1009
    %v1012 = vadd.f32 %v709, %v1011
    %v1013 = vmul.f32 %v820, %v1009
    %v1014 = vadd.f32 %v745, %v1013
    %v1015 = vmul.f32 %v823, %v1009
    %v1016 = vadd.f32 %v781, %v1015
    %v1017 = vsel %vm432, %v1006, 0.0
    %1018 = vadd.xlane.f32.xlu0 %v1017
    %v1019 = vpop.xlane.xlu0 %1018
    %v1020 = vmul.f32 %v1019, %v442
    %v1021 = vsub.f32 %v1006, %v1020
    %v1022 = vmul.f32 %v1021, %v1021
    %v1023 = vsel %vm432, %v1022, 0.0
    %1024 = vadd.xlane.f32.xlu0 %v1023
    %v1025 = vpop.xlane.xlu0 %1024
    %v1026 = vmul.f32 %v1025, %v442
    %v1027 = vadd.f32 %v1026, 1e-05
    %v1028 = vrsqrt.pop %v1027
    %v1029 = vmul.f32 %v1028, %v1027
    %v1030 = vmul.f32 %v1029, %v1028
    %v1031 = vmul.f32 0.5, %v1030
    %v1032 = vsub.f32 1.5, %v1031
    %v1033 = vmul.f32 %v1028, %v1032
    %vm1034 = vweird.f32 %v1027
    %vm1035 = vweird.f32 %v1028
    %vm1036 = vmor %vm1034, %vm1035
    %v1037 = vsel %vm1036, %v1028, %v1033
    %v1038 = vmul.f32 %v1021, %v1037
    %s1039 = scalar_lea.vmem [#allocation10], 1
    %v1040 = vld [vmem:[%s1039] sm:$0x1]
    %v1042 = vperm.slane %v1040, 0
    %v1044 = vmul.f32 %v1038, %v1042
    %s1045 = scalar_lea.vmem [#allocation11], 1
    %v1046 = vld [vmem:[%s1045] sm:$0x1]
    %v1048 = vperm.slane %v1046, 0
    %v1050 = vadd.f32 %v1044, %v1048
    %s1051 = scalar_lea.vmem %s19, 16
    %v1052 = vld [vmem:[%s1051] sm:$0xf]
    %v1053 = vld [vmem:[%s1051 + $0x4] sm:$0xf]
    %v1054 = vld [vmem:[%s1051 + $0x8] sm:$0xf]
    %v1055 = vld [vmem:[%s1051 + $0xc] sm:$0xf]
    %v1056 = vpack.c.bf16 %v1050, %v1050
    %s1057 = scalar_lea.vmem [#allocation13], 1
    %v1058 = vld [vmem:[%s1057] sm:$0x1]
    %v1060 = vperm.slane %v1058, 0
    %v1066 = vunpack.c.l.b16 %v1052
    %v1067 = vunpack.c.l.b16 %v1053
    %v1068 = vunpack.c.l.b16 %v1054
    %v1069 = vunpack.c.l.b16 %v1055
    %v1070 = vpack.c.b16 %v1067, %v1066
    %v1071 = vpack.c.b16 %v1069, %v1068
    %v1075 = vsel %vm432, %v1056, 0
    %1077 = vmatpush.bf16.msra.mxu0 0
    %1078 = vmatpush.bf16.msra.mxu0 0
    %1079 = vmatpush.bf16.msra.mxu0 0
    %1080 = vmatpush.bf16.msra.mxu0 0
    %1081 = vmatpush.bf16.msra.mxu0 0
    %1082 = vmatpush.bf16.msra.mxu0 0
    %1083 = vmatpush.bf16.msra.mxu0 %v1071
    %1084 = vmatpush.bf16.msra.mxu0 %v1070
    %1085 = vmatmul.bf16.gmra.mxu0 %v1075
    %v1086 = vpop.f32.mrf.mxu0
    %v1087 = vadd.f32 %v1060, %v1086
    %v1088 = vpop.f32.mrf.mxu0
    %1089 = vdwg.mxu0
    %v1090 = vxor.u32 %v1087, 2147483648
    %v1091 = vmul.f32 %v1090, 1.442695
    %v1092 = vpow.pop %v1091
    %v1093 = vadd.f32 %v1092, 1.0
    %v1094 = vrcp.pop %v1093
    %v1095 = vmul.f32 %v1093, %v1094
    %v1096 = vsub.f32 1.0, %v1095
    %v1097 = vmul.f32 %v1094, %v1096
    %v1098 = vadd.f32 %v1094, %v1097
    %vm1099 = vweird.f32 %v1093
    %vm1100 = vweird.f32 %v1094
    %vm1101 = vmor %vm1099, %vm1100
    %v1102 = vsel %vm1101, %v1094, %v1098
    %v1103 = vand.u32 2147483647, %v1093
    %vm1104 = vcmp.eq.f32.partialorder %v1103, 8.507059e+37
    %v1105 = vand.u32 %v1093, 2147483648
    %v1106 = vor.u32 1.1754944e-38, %v1105
    %v1107 = vsel %vm1104, %v1106, %v1102
    %v1108 = vmul.f32 1.0, %v1107
    %v1109 = vmul.f32 %v1087, %v1108
    %v1110 = vmul.f32 %v1109, 1.6666666
    %s1111 = scalar_lea.vmem %s23, 16
    %v1112 = vld [vmem:[%s1111] sm:$0xf]
    %v1113 = vld [vmem:[%s1111 + $0x4] sm:$0xf]
    %v1114 = vld [vmem:[%s1111 + $0x8] sm:$0xf]
    %v1115 = vld [vmem:[%s1111 + $0xc] sm:$0xf]
    %v1116 = vpack.c.bf16 %v1110, %v1110
    %s1117 = scalar_lea.vmem [#allocation14], 1
    %v1118 = vld [vmem:[%s1117] sm:$0x1]
    %v1120 = vperm.slane %v1118, 0
    %v1126 = vunpack.c.l.b16 %v1112
    %v1127 = vunpack.c.l.b16 %v1113
    %v1128 = vunpack.c.l.b16 %v1114
    %v1129 = vunpack.c.l.b16 %v1115
    %v1130 = vpack.c.b16 %v1127, %v1126
    %v1131 = vpack.c.b16 %v1129, %v1128
    %v1135 = vsel %vm432, %v1116, 0
    %1137 = vmatpush.bf16.msra.mxu0 0
    %1138 = vmatpush.bf16.msra.mxu0 0
    %1139 = vmatpush.bf16.msra.mxu0 0
    %1140 = vmatpush.bf16.msra.mxu0 0
    %1141 = vmatpush.bf16.msra.mxu0 0
    %1142 = vmatpush.bf16.msra.mxu0 0
    %1143 = vmatpush.bf16.msra.mxu0 %v1131
    %1144 = vmatpush.bf16.msra.mxu0 %v1130
    %1145 = vmatmul.bf16.gmra.mxu0 %v1135
    %v1146 = vpop.f32.mrf.mxu0
    %v1147 = vadd.f32 %v1120, %v1146
    %v1148 = vpop.f32.mrf.mxu0
    %1149 = vdwg.mxu0
    %s1150 = scalar_lea.vmem [#allocation16], 8
    %v1151 = vld [vmem:[%s1150] sm:$0xf]
    %v1152 = vld [vmem:[%s1150 + $0x4] sm:$0xf]
    %s1153 = scalar_lea.vmem [#allocation17], 1
    %v1154 = vld [vmem:[%s1153] sm:$0x1]
    %v1156 = vperm.slane %v1154, 0
    %v1160 = vunpack.c.l.b16 %v1151
    %v1161 = vunpack.c.l.b16 %v1152
    %v1162 = vpack.c.b16 %v1161, %v1160
    %1164 = vmatpush.bf16.msra.mxu0 0
    %1165 = vmatpush.bf16.msra.mxu0 0
    %1166 = vmatpush.bf16.msra.mxu0 0
    %1167 = vmatpush.bf16.msra.mxu0 0
    %1168 = vmatpush.bf16.msra.mxu0 0
    %1169 = vmatpush.bf16.msra.mxu0 0
    %1170 = vmatpush.bf16.msra.mxu0 0
    %1171 = vmatpush.bf16.msra.mxu0 %v1162
    %1172 = vmatmul.bf16.gmra.mxu0 %v582
    %v1173 = vpop.f32.mrf.mxu0
    %v1174 = vadd.f32 %v1156, %v1173
    %v1175 = vpop.f32.mrf.mxu0
    %v1176 = vadd.f32 %v1156, %v1175
    %1177 = vdwg.mxu0
    %v1178 = vpack.c.bf16 %v1147, %v1147
    %v1180 = vsel %vm608, %v1178, 0
    %1182 = vmatpush.bf16.msra.mxu0 0
    %1183 = vmatpush.bf16.msra.mxu0 0
    %1184 = vmatpush.bf16.msra.mxu0 0
    %1185 = vmatpush.bf16.msra.mxu0 0
    %1186 = vmatpush.bf16.msra.mxu0 0
    %1187 = vmatpush.bf16.msra.mxu0 0
    %1188 = vmatpush.bf16.msra.mxu0 0
    %1189 = vmatpush.bf16.msra.mxu0 %v1180
    %1190 = vmatmul.bf16.gmra.mxu0 %v606
    %v1191 = vpop.f32.mrf.mxu0
    %v1192 = vadd.f32 0.0, %v1191
    %v1193 = vpop.f32.mrf.mxu0
    %v1194 = vadd.f32 0.0, %v1193
    %1195 = vdwg.mxu0
    %v1196 = vpack.c.bf16 %v1012, %v1012
    %v1198 = vsel %vm608, %v1196, 0
    %1200 = vmatpush.bf16.msra.mxu0 0
    %1201 = vmatpush.bf16.msra.mxu0 0
    %1202 = vmatpush.bf16.msra.mxu0 0
    %1203 = vmatpush.bf16.msra.mxu0 0
    %1204 = vmatpush.bf16.msra.mxu0 0
    %1205 = vmatpush.bf16.msra.mxu0 0
    %1206 = vmatpush.bf16.msra.mxu0 0
    %1207 = vmatpush.bf16.msra.mxu0 %v1198
    %1208 = vmatmul.bf16.gmra.mxu0 %v606
    %v1209 = vpop.f32.mrf.mxu0
    %v1210 = vadd.f32 0.0, %v1209
    %v1211 = vpop.f32.mrf.mxu0
    %v1212 = vadd.f32 0.0, %v1211
    %1213 = vdwg.mxu0
    %v1214 = vpack.c.bf16 %v1014, %v1014
    %v1216 = vsel %vm608, %v1214, 0
    %1218 = vmatpush.bf16.msra.mxu0 0
    %1219 = vmatpush.bf16.msra.mxu0 0
    %1220 = vmatpush.bf16.msra.mxu0 0
    %1221 = vmatpush.bf16.msra.mxu0 0
    %1222 = vmatpush.bf16.msra.mxu0 0
    %1223 = vmatpush.bf16.msra.mxu0 0
    %1224 = vmatpush.bf16.msra.mxu0 0
    %1225 = vmatpush.bf16.msra.mxu0 %v1216
    %1226 = vmatmul.bf16.gmra.mxu0 %v606
    %v1227 = vpop.f32.mrf.mxu0
    %v1228 = vadd.f32 0.0, %v1227
    %v1229 = vpop.f32.mrf.mxu0
    %v1230 = vadd.f32 0.0, %v1229
    %1231 = vdwg.mxu0
    %v1232 = vpack.c.bf16 %v1016, %v1016
    %v1234 = vsel %vm608, %v1232, 0
    %1236 = vmatpush.bf16.msra.mxu0 0
    %1237 = vmatpush.bf16.msra.mxu0 0
    %1238 = vmatpush.bf16.msra.mxu0 0
    %1239 = vmatpush.bf16.msra.mxu0 0
    %1240 = vmatpush.bf16.msra.mxu0 0
    %1241 = vmatpush.bf16.msra.mxu0 0
    %1242 = vmatpush.bf16.msra.mxu0 0
    %1243 = vmatpush.bf16.msra.mxu0 %v1234
    %1244 = vmatmul.bf16.gmra.mxu0 %v606
    %v1245 = vpop.f32.mrf.mxu0
    %v1246 = vadd.f32 0.0, %v1245
    %v1247 = vpop.f32.mrf.mxu0
    %v1248 = vadd.f32 0.0, %v1247
    %1249 = vdwg.mxu0
    %v1250 = vmul.f32 %v1192, %v1174
    %v1251 = vmul.f32 %v1194, %v1176
    %v1252 = vmul.f32 %v1250, 0.57735026
    %v1253 = vmul.f32 %v1251, 0.57735026
    %v1254 = vpack.c.bf16 %v1251, %v1250
    %1255 = vmatpush.bf16.msra.mxu0 0
    %1256 = vmatpush.bf16.msra.mxu0 0
    %1257 = vmatpush.bf16.msra.mxu0 0
    %1258 = vmatpush.bf16.msra.mxu0 0
    %1259 = vmatpush.bf16.msra.mxu0 0
    %1260 = vmatpush.bf16.msra.mxu0 0
    %1261 = vmatpush.bf16.msra.mxu0 0
    %1262 = vmatpush.bf16.msra.mxu0 %v1254
    %1263 = vmatmul.bf16.gmra.mxu0 %v649
    %v1264 = vpop.f32.mrf.mxu0
    %v1265 = vadd.f32 0.0, %v1264
    %v1266 = vpop.f32.mrf.mxu0
    %1267 = vdwg.mxu0
    %v1268 = vadd.f32 %v1006, %v1265
    %v1269 = vmul.f32 %v1268, 0.70710677
    %1272 = vrot.lane.b32.xlu0 %v1252, 96
    %v1273 = vpop.permute.xlu0 %1272
    %1274 = vrot.lane.b32.xlu0 %v1253, 96
    %v1275 = vpop.permute.xlu0 %1274
    %v1278 = vmul.f32 %v1210, %v1273
    %v1279 = vmul.f32 %v1212, %v1275
    %v1280 = vmul.f32 %v1250, %v679
    %v1281 = vmul.f32 %v1251, %v681
    %1284 = vrot.lane.b32.xlu0 %v1280, 64
    %v1285 = vpop.permute.xlu0 %1284
    %1286 = vrot.lane.b32.xlu0 %v1281, 64
    %v1287 = vpop.permute.xlu0 %1286
    %v1290 = vadd.f32 %v1278, %v1285
    %v1291 = vadd.f32 %v1279, %v1287
    %v1292 = vmul.f32 %v1290, 0.17677669
    %v1293 = vmul.f32 %v1291, 0.17677669
    %v1294 = vpack.c.bf16 %v1293, %v1292
    %1295 = vmatpush.bf16.msra.mxu0 0
    %1296 = vmatpush.bf16.msra.mxu0 0
    %1297 = vmatpush.bf16.msra.mxu0 0
    %1298 = vmatpush.bf16.msra.mxu0 0
    %1299 = vmatpush.bf16.msra.mxu0 0
    %1300 = vmatpush.bf16.msra.mxu0 0
    %1301 = vmatpush.bf16.msra.mxu0 0
    %1302 = vmatpush.bf16.msra.mxu0 %v1294
    %1303 = vmatmul.bf16.gmra.mxu0 %v649
    %v1304 = vpop.f32.mrf.mxu0
    %v1305 = vadd.f32 0.0, %v1304
    %v1306 = vpop.f32.mrf.mxu0
    %1307 = vdwg.mxu0
    %v1308 = vadd.f32 %v1012, %v1305
    %v1309 = vmul.f32 %v1228, %v1273
    %v1310 = vmul.f32 %v1230, %v1275
    %v1311 = vmul.f32 %v1250, %v715
    %v1312 = vmul.f32 %v1251, %v717
    %1315 = vrot.lane.b32.xlu0 %v1311, 64
    %v1316 = vpop.permute.xlu0 %1315
    %1317 = vrot.lane.b32.xlu0 %v1312, 64
    %v1318 = vpop.permute.xlu0 %1317
    %v1321 = vadd.f32 %v1309, %v1316
    %v1322 = vadd.f32 %v1310, %v1318
    %v1323 = vmul.f32 %v1321, 0.17677669
    %v1324 = vmul.f32 %v1322, 0.17677669
    %v1325 = vpack.c.bf16 %v1324, %v1323
    %1326 = vmatpush.bf16.msra.mxu0 0
    %1327 = vmatpush.bf16.msra.mxu0 0
    %1328 = vmatpush.bf16.msra.mxu0 0
    %1329 = vmatpush.bf16.msra.mxu0 0
    %1330 = vmatpush.bf16.msra.mxu0 0
    %1331 = vmatpush.bf16.msra.mxu0 0
    %1332 = vmatpush.bf16.msra.mxu0 0
    %1333 = vmatpush.bf16.msra.mxu0 %v1325
    %1334 = vmatmul.bf16.gmra.mxu0 %v649
    %v1335 = vpop.f32.mrf.mxu0
    %v1336 = vadd.f32 0.0, %v1335
    %v1337 = vpop.f32.mrf.mxu0
    %1338 = vdwg.mxu0
    %v1339 = vadd.f32 %v1014, %v1336
    %v1340 = vmul.f32 %v1246, %v1273
    %v1341 = vmul.f32 %v1248, %v1275
    %v1342 = vmul.f32 %v1250, %v751
    %v1343 = vmul.f32 %v1251, %v753
    %1346 = vrot.lane.b32.xlu0 %v1342, 64
    %v1347 = vpop.permute.xlu0 %1346
    %1348 = vrot.lane.b32.xlu0 %v1343, 64
    %v1349 = vpop.permute.xlu0 %1348
    %v1352 = vadd.f32 %v1340, %v1347
    %v1353 = vadd.f32 %v1341, %v1349
    %v1354 = vmul.f32 %v1352, 0.17677669
    %v1355 = vmul.f32 %v1353, 0.17677669
    %v1356 = vpack.c.bf16 %v1355, %v1354
    %1357 = vmatpush.bf16.msra.mxu0 0
    %1358 = vmatpush.bf16.msra.mxu0 0
    %1359 = vmatpush.bf16.msra.mxu0 0
    %1360 = vmatpush.bf16.msra.mxu0 0
    %1361 = vmatpush.bf16.msra.mxu0 0
    %1362 = vmatpush.bf16.msra.mxu0 0
    %1363 = vmatpush.bf16.msra.mxu0 0
    %1364 = vmatpush.bf16.msra.mxu0 %v1356
    %1365 = vmatmul.bf16.gmra.mxu0 %v649
    %v1366 = vpop.f32.mrf.mxu0
    %v1367 = vadd.f32 0.0, %v1366
    %v1368 = vpop.f32.mrf.mxu0
    %1369 = vdwg.mxu0
    %v1370 = vadd.f32 %v1016, %v1367
    %s1371 = scalar_lea.vmem %s31, 16
    %v1372 = vld [vmem:[%s1371] sm:$0xf]
    %v1373 = vld [vmem:[%s1371 + $0x4] sm:$0xf]
    %v1374 = vld [vmem:[%s1371 + $0x8] sm:$0xf]
    %v1375 = vld [vmem:[%s1371 + $0xc] sm:$0xf]
    %v1376 = vpack.c.bf16 %v1339, %v1308
    %v1377 = vpack.c.bf16 %v1370, %v1370
    %v1382 = vunpack.c.l.b16 %v1372
    %v1383 = vunpack.c.l.b16 %v1373
    %v1384 = vunpack.c.l.b16 %v1374
    %v1385 = vunpack.c.l.b16 %v1375
    %v1386 = vpack.c.b16 %v1383, %v1382
    %v1387 = vpack.c.b16 %v1385, %v1384
    %v1391 = vsel %vm432, %v1376, 0
    %v1394 = vsel %vm432, %v1377, 0
    %1396 = vmatpush.bf16.msra.mxu0 0
    %1397 = vmatpush.bf16.msra.mxu0 0
    %1398 = vmatpush.bf16.msra.mxu0 0
    %1399 = vmatpush.bf16.msra.mxu0 0
    %1400 = vmatpush.bf16.msra.mxu0 0
    %1401 = vmatpush.bf16.msra.mxu0 0
    %1402 = vmatpush.bf16.msra.mxu0 %v1387
    %1403 = vmatpush.bf16.msra.mxu0 %v1386
    %1404 = vmatmul.bf16.gmra.mxu0 %v1391
    %v1405 = vpop.f32.mrf.mxu0
    %v1406 = vadd.f32 0.0, %v1405
    %v1407 = vpop.f32.mrf.mxu0
    %v1408 = vadd.f32 0.0, %v1407
    %1409 = vmatmul.bf16.gmra.mxu0 %v1394
    %v1410 = vpop.f32.mrf.mxu0
    %v1411 = vadd.f32 0.0, %v1410
    %v1412 = vpop.f32.mrf.mxu0
    %1413 = vdwg.mxu0
    %1415 = vrot.lane.b32.xlu0 %v1406, 96
    %v1416 = vpop.permute.xlu0 %1415
    %v1418 = vmul.f32 %v1406, %v1416
    %1420 = vrot.lane.b32.xlu0 %v1408, 96
    %v1421 = vpop.permute.xlu0 %1420
    %v1423 = vmul.f32 %v1408, %v1421
    %v1424 = vadd.f32 %v1418, %v1423
    %1426 = vrot.lane.b32.xlu0 %v1411, 96
    %v1427 = vpop.permute.xlu0 %1426
    %v1429 = vmul.f32 %v1411, %v1427
    %v1430 = vadd.f32 %v1424, %v1429
    %v1431 = vmul.f32 %v1430, 0.17677669
    %v1432 = vmul.f32 %v1406, %v1406
    %v1433 = vmul.f32 %v1408, %v1408
    %v1434 = vadd.f32 %v1432, %v1433
    %v1435 = vmul.f32 %v1411, %v1411
    %v1436 = vadd.f32 %v1434, %v1435
    %v1437 = vadd.f32 %v1436, 1e-08
    %v1438 = vrsqrt.pop %v1437
    %v1439 = vmul.f32 %v1438, %v1437
    %v1440 = vmul.f32 %v1439, %v1438
    %v1441 = vmul.f32 0.5, %v1440
    %v1442 = vsub.f32 1.5, %v1441
    %v1443 = vmul.f32 %v1438, %v1442
    %v1444 = vmul.f32 %v1437, %v1443
    %vm1445 = vcmp.eq.f32.partialorder %v1437, inf
    %v1446 = vsel %vm1445, %v1437, %v1444
    %vm1447 = vcmp.eq.f32.partialorder %v1437, 0.0
    %v1448 = vand.u32 %v1437, 2147483648
    %v1449 = vsel %vm1447, %v1448, %v1446
    %s1450 = scalar_lea.vmem %s33, 16
    %v1451 = vld [vmem:[%s1450] sm:$0xf]
    %v1452 = vld [vmem:[%s1450 + $0x4] sm:$0xf]
    %v1453 = vld [vmem:[%s1450 + $0x8] sm:$0xf]
    %v1454 = vld [vmem:[%s1450 + $0xc] sm:$0xf]
    %v1455 = vpack.c.bf16 %v1269, %v1269
    %s1456 = scalar_lea.vmem %s35, 16
    %v1457 = vld [vmem:[%s1456] sm:$0xf]
    %v1458 = vld [vmem:[%s1456 + $0x4] sm:$0xf]
    %v1459 = vld [vmem:[%s1456 + $0x8] sm:$0xf]
    %v1460 = vld [vmem:[%s1456 + $0xc] sm:$0xf]
    %v1461 = vpack.c.bf16 %v1449, %v1449
    %1463 = vrot.lane.b32.xlu0 %v1461, 96
    %v1464 = vpop.permute.xlu0 %1463
    %v1469 = vunpack.c.l.b16 %v1457
    %v1470 = vunpack.c.l.b16 %v1458
    %v1471 = vunpack.c.l.b16 %v1459
    %v1472 = vunpack.c.l.b16 %v1460
    %v1473 = vpack.c.b16 %v1470, %v1469
    %v1474 = vpack.c.b16 %v1472, %v1471
    %v1478 = vsel %vm432, %v1464, 0
    %1480 = vmatpush.bf16.msra.mxu0 0
    %1481 = vmatpush.bf16.msra.mxu0 0
    %1482 = vmatpush.bf16.msra.mxu0 0
    %1483 = vmatpush.bf16.msra.mxu0 0
    %1484 = vmatpush.bf16.msra.mxu0 0
    %1485 = vmatpush.bf16.msra.mxu0 0
    %1486 = vmatpush.bf16.msra.mxu0 %v1474
    %1487 = vmatpush.bf16.msra.mxu0 %v1473
    %1488 = vmatmul.bf16.gmra.mxu0 %v1478
    %v1489 = vpop.f32.mrf.mxu0
    %v1490 = vadd.f32 0.0, %v1489
    %v1491 = vpop.f32.mrf.mxu0
    %1492 = vdwg.mxu0
    %v1497 = vunpack.c.l.b16 %v1451
    %v1498 = vunpack.c.l.b16 %v1452
    %v1499 = vunpack.c.l.b16 %v1453
    %v1500 = vunpack.c.l.b16 %v1454
    %v1501 = vpack.c.b16 %v1498, %v1497
    %v1502 = vpack.c.b16 %v1500, %v1499
    %v1506 = vsel %vm432, %v1455, 0
    %1508 = vmatpush.bf16.msra.mxu0 0
    %1509 = vmatpush.bf16.msra.mxu0 0
    %1510 = vmatpush.bf16.msra.mxu0 0
    %1511 = vmatpush.bf16.msra.mxu0 0
    %1512 = vmatpush.bf16.msra.mxu0 0
    %1513 = vmatpush.bf16.msra.mxu0 0
    %1514 = vmatpush.bf16.msra.mxu0 %v1502
    %1515 = vmatpush.bf16.msra.mxu0 %v1501
    %1516 = vmatmul.bf16.gmra.mxu0 %v1506
    %v1517 = vpop.f32.mrf.mxu0
    %v1518 = vadd.f32 %v1490, %v1517
    %v1519 = vpop.f32.mrf.mxu0
    %1520 = vdwg.mxu0
    %s1521 = scalar_lea.vmem [#allocation19], 1
    %v1522 = vld [vmem:[%s1521] sm:$0x1]
    %v1524 = vperm.slane %v1522, 0
    %v1526 = vadd.f32 %v1518, %v1524
    %v1527 = vxor.u32 %v1526, 2147483648
    %v1528 = vmul.f32 %v1527, 1.442695
    %v1529 = vpow.pop %v1528
    %v1530 = vadd.f32 %v1529, 1.0
    %v1531 = vrcp.pop %v1530
    %v1532 = vmul.f32 %v1530, %v1531
    %v1533 = vsub.f32 1.0, %v1532
    %v1534 = vmul.f32 %v1531, %v1533
    %v1535 = vadd.f32 %v1531, %v1534
    %vm1536 = vweird.f32 %v1530
    %vm1537 = vweird.f32 %v1531
    %vm1538 = vmor %vm1536, %vm1537
    %v1539 = vsel %vm1538, %v1531, %v1535
    %v1540 = vand.u32 2147483647, %v1530
    %vm1541 = vcmp.eq.f32.partialorder %v1540, 8.507059e+37
    %v1542 = vand.u32 %v1530, 2147483648
    %v1543 = vor.u32 1.1754944e-38, %v1542
    %v1544 = vsel %vm1541, %v1543, %v1539
    %v1545 = vmul.f32 1.0, %v1544
    %v1546 = vmul.f32 %v1526, %v1545
    %v1547 = vmul.f32 %v1546, 1.6666666
    %s1548 = scalar_lea.vmem [#allocation20], 16
    %v1549 = vld [vmem:[%s1548] sm:$0xf]
    %v1550 = vld [vmem:[%s1548 + $0x4] sm:$0xf]
    %v1551 = vld [vmem:[%s1548 + $0x8] sm:$0xf]
    %v1552 = vld [vmem:[%s1548 + $0xc] sm:$0xf]
    %v1553 = vpack.c.bf16 %v1547, %v1547
    %s1554 = scalar_lea.vmem [#allocation22], 1
    %v1555 = vld [vmem:[%s1554] sm:$0x1]
    %v1557 = vperm.slane %v1555, 0
    %v1563 = vunpack.c.l.b16 %v1549
    %v1564 = vunpack.c.l.b16 %v1550
    %v1565 = vunpack.c.l.b16 %v1551
    %v1566 = vunpack.c.l.b16 %v1552
    %v1567 = vpack.c.b16 %v1564, %v1563
    %v1568 = vpack.c.b16 %v1566, %v1565
    %v1572 = vsel %vm432, %v1553, 0
    %1574 = vmatpush.bf16.msra.mxu0 0
    %1575 = vmatpush.bf16.msra.mxu0 0
    %1576 = vmatpush.bf16.msra.mxu0 0
    %1577 = vmatpush.bf16.msra.mxu0 0
    %1578 = vmatpush.bf16.msra.mxu0 0
    %1579 = vmatpush.bf16.msra.mxu0 0
    %1580 = vmatpush.bf16.msra.mxu0 %v1568
    %1581 = vmatpush.bf16.msra.mxu0 %v1567
    %1582 = vmatmul.bf16.gmra.mxu0 %v1572
    %v1583 = vpop.f32.mrf.mxu0
    %v1584 = vadd.f32 %v1557, %v1583
    %v1585 = vpop.f32.mrf.mxu0
    %1586 = vdwg.mxu0
    %1588 = vrot.lane.b32.xlu0 %v1431, 32
    %v1589 = vpop.permute.xlu0 %1588
    %v1591 = vmul.f32 %v1584, %v1589
    %1593 = vrot.lane.b32.xlu0 %v1591, 96
    %v1594 = vpop.permute.xlu0 %1593
    %v1596 = vadd.f32 %v1584, %v1594
    %v1597 = vmul.f32 %v1596, 0.70710677
    %v1598 = vadd.f32 %v1269, %v1597
    %v1599 = vmul.f32 %v1598, 0.70710677
    %1601 = vrot.lane.b32.xlu0 %v1584, 64
    %v1602 = vpop.permute.xlu0 %1601
    %v1604 = vmul.f32 %v1406, %v1602
    %v1605 = vadd.f32 %v1308, %v1604
    %v1606 = vmul.f32 %v1408, %v1602
    %v1607 = vadd.f32 %v1339, %v1606
    %v1608 = vmul.f32 %v1411, %v1602
    %v1609 = vadd.f32 %v1370, %v1608
    %v1610 = vld [vmem:[%s43] sm:$0xf]
    %v1611 = vld [vmem:[%s43 + $0x4] sm:$0xf]
    %v1612 = vld [vmem:[%s43 + $0x8] sm:$0xf]
    %v1613 = vld [vmem:[%s43 + $0xc] sm:$0xf]
    %v1614 = vpack.c.bf16 %v1607, %v1605
    %v1615 = vpack.c.bf16 %v1609, %v1609
    %v1620 = vunpack.c.l.b16 %v1610
    %v1621 = vunpack.c.l.b16 %v1611
    %v1622 = vunpack.c.l.b16 %v1612
    %v1623 = vunpack.c.l.b16 %v1613
    %v1624 = vpack.c.b16 %v1621, %v1620
    %v1625 = vpack.c.b16 %v1623, %v1622
    %v1629 = vsel %vm432, %v1614, 0
    %v1632 = vsel %vm432, %v1615, 0
    %1634 = vmatpush.bf16.msra.mxu0 0
    %1635 = vmatpush.bf16.msra.mxu0 0
    %1636 = vmatpush.bf16.msra.mxu0 0
    %1637 = vmatpush.bf16.msra.mxu0 0
    %1638 = vmatpush.bf16.msra.mxu0 0
    %1639 = vmatpush.bf16.msra.mxu0 0
    %1640 = vmatpush.bf16.msra.mxu0 %v1625
    %1641 = vmatpush.bf16.msra.mxu0 %v1624
    %1642 = vmatmul.bf16.gmra.mxu0 %v1629
    %v1643 = vpop.f32.mrf.mxu0
    %v1644 = vadd.f32 0.0, %v1643
    %v1645 = vpop.f32.mrf.mxu0
    %v1646 = vadd.f32 0.0, %v1645
    %1647 = vmatmul.bf16.gmra.mxu0 %v1632
    %v1648 = vpop.f32.mrf.mxu0
    %v1649 = vadd.f32 0.0, %v1648
    %v1650 = vpop.f32.mrf.mxu0
    %1651 = vdwg.mxu0
    %v1652 = vld [vmem:[%s45] sm:$0xf]
    %v1653 = vld [vmem:[%s45 + $0x4] sm:$0xf]
    %v1654 = vld [vmem:[%s45 + $0x8] sm:$0xf]
    %v1655 = vld [vmem:[%s45 + $0xc] sm:$0xf]
    %v1660 = vunpack.c.l.b16 %v1652
    %v1661 = vunpack.c.l.b16 %v1653
    %v1662 = vunpack.c.l.b16 %v1654
    %v1663 = vunpack.c.l.b16 %v1655
    %v1664 = vpack.c.b16 %v1661, %v1660
    %v1665 = vpack.c.b16 %v1663, %v1662
    %1668 = vmatpush.bf16.msra.mxu0 0
    %1669 = vmatpush.bf16.msra.mxu0 0
    %1670 = vmatpush.bf16.msra.mxu0 0
    %1671 = vmatpush.bf16.msra.mxu0 0
    %1672 = vmatpush.bf16.msra.mxu0 0
    %1673 = vmatpush.bf16.msra.mxu0 0
    %1674 = vmatpush.bf16.msra.mxu0 %v1665
    %1675 = vmatpush.bf16.msra.mxu0 %v1664
    %1676 = vmatmul.bf16.gmra.mxu0 %v1629
    %v1677 = vpop.f32.mrf.mxu0
    %v1678 = vadd.f32 0.0, %v1677
    %v1679 = vpop.f32.mrf.mxu0
    %v1680 = vadd.f32 0.0, %v1679
    %1681 = vmatmul.bf16.gmra.mxu0 %v1632
    %v1682 = vpop.f32.mrf.mxu0
    %v1683 = vadd.f32 0.0, %v1682
    %v1684 = vpop.f32.mrf.mxu0
    %1685 = vdwg.mxu0
    %v1686 = vmul.f32 %v1644, %v1644
    %v1687 = vmul.f32 %v1646, %v1646
    %v1688 = vadd.f32 %v1686, %v1687
    %v1689 = vmul.f32 %v1649, %v1649
    %v1690 = vadd.f32 %v1688, %v1689
    %v1691 = vrsqrt.pop %v1690
    %v1692 = vmul.f32 %v1691, %v1690
    %v1693 = vmul.f32 %v1692, %v1691
    %v1694 = vmul.f32 0.5, %v1693
    %v1695 = vsub.f32 1.5, %v1694
    %v1696 = vmul.f32 %v1691, %v1695
    %v1697 = vmul.f32 %v1690, %v1696
    %vm1698 = vcmp.eq.f32.partialorder %v1690, inf
    %v1699 = vsel %vm1698, %v1690, %v1697
    %vm1700 = vcmp.eq.f32.partialorder %v1690, 0.0
    %v1701 = vand.u32 %v1690, 2147483648
    %v1702 = vsel %vm1700, %v1701, %v1699
    %v1703 = vld [vmem:[#allocation23] sm:$0xf]
    %v1704 = vld [vmem:[#allocation23 + $0x4] sm:$0xf]
    %v1705 = vld [vmem:[#allocation23 + $0x8] sm:$0xf]
    %v1706 = vld [vmem:[#allocation23 + $0xc] sm:$0xf]
    %v1707 = vpack.c.bf16 %v1599, %v1599
    %v1708 = vld [vmem:[#allocation25] sm:$0xf]
    %v1709 = vld [vmem:[#allocation25 + $0x4] sm:$0xf]
    %v1710 = vld [vmem:[#allocation25 + $0x8] sm:$0xf]
    %v1711 = vld [vmem:[#allocation25 + $0xc] sm:$0xf]
    %v1712 = vpack.c.bf16 %v1702, %v1702
    %v1717 = vunpack.c.l.b16 %v1708
    %v1718 = vunpack.c.l.b16 %v1709
    %v1719 = vunpack.c.l.b16 %v1710
    %v1720 = vunpack.c.l.b16 %v1711
    %v1721 = vpack.c.b16 %v1718, %v1717
    %v1722 = vpack.c.b16 %v1720, %v1719
    %v1726 = vsel %vm432, %v1712, 0
    %1728 = vmatpush.bf16.msra.mxu0 0
    %1729 = vmatpush.bf16.msra.mxu0 0
    %1730 = vmatpush.bf16.msra.mxu0 0
    %1731 = vmatpush.bf16.msra.mxu0 0
    %1732 = vmatpush.bf16.msra.mxu0 0
    %1733 = vmatpush.bf16.msra.mxu0 0
    %1734 = vmatpush.bf16.msra.mxu0 %v1722
    %1735 = vmatpush.bf16.msra.mxu0 %v1721
    %1736 = vmatmul.bf16.gmra.mxu0 %v1726
    %v1737 = vpop.f32.mrf.mxu0
    %v1738 = vadd.f32 0.0, %v1737
    %v1739 = vpop.f32.mrf.mxu0
    %1740 = vdwg.mxu0
    %v1745 = vunpack.c.l.b16 %v1703
    %v1746 = vunpack.c.l.b16 %v1704
    %v1747 = vunpack.c.l.b16 %v1705
    %v1748 = vunpack.c.l.b16 %v1706
    %v1749 = vpack.c.b16 %v1746, %v1745
    %v1750 = vpack.c.b16 %v1748, %v1747
    %v1754 = vsel %vm432, %v1707, 0
    %1756 = vmatpush.bf16.msra.mxu0 0
    %1757 = vmatpush.bf16.msra.mxu0 0
    %1758 = vmatpush.bf16.msra.mxu0 0
    %1759 = vmatpush.bf16.msra.mxu0 0
    %1760 = vmatpush.bf16.msra.mxu0 0
    %1761 = vmatpush.bf16.msra.mxu0 0
    %1762 = vmatpush.bf16.msra.mxu0 %v1750
    %1763 = vmatpush.bf16.msra.mxu0 %v1749
    %1764 = vmatmul.bf16.gmra.mxu0 %v1754
    %v1765 = vpop.f32.mrf.mxu0
    %v1766 = vadd.f32 %v1738, %v1765
    %v1767 = vpop.f32.mrf.mxu0
    %1768 = vdwg.mxu0
    %v1769 = vld [vmem:[%s51] sm:$0x1]
    %v1771 = vperm.slane %v1769, 0
    %v1773 = vadd.f32 %v1766, %v1771
    %v1774 = vxor.u32 %v1773, 2147483648
    %v1775 = vmul.f32 %v1774, 1.442695
    %v1776 = vpow.pop %v1775
    %v1777 = vadd.f32 %v1776, 1.0
    %v1778 = vrcp.pop %v1777
    %v1779 = vmul.f32 %v1777, %v1778
    %v1780 = vsub.f32 1.0, %v1779
    %v1781 = vmul.f32 %v1778, %v1780
    %v1782 = vadd.f32 %v1778, %v1781
    %vm1783 = vweird.f32 %v1777
    %vm1784 = vweird.f32 %v1778
    %vm1785 = vmor %vm1783, %vm1784
    %v1786 = vsel %vm1785, %v1778, %v1782
    %v1787 = vand.u32 2147483647, %v1777
    %vm1788 = vcmp.eq.f32.partialorder %v1787, 8.507059e+37
    %v1789 = vand.u32 %v1777, 2147483648
    %v1790 = vor.u32 1.1754944e-38, %v1789
    %v1791 = vsel %vm1788, %v1790, %v1786
    %v1792 = vmul.f32 1.0, %v1791
    %v1793 = vmul.f32 %v1773, %v1792
    %v1794 = vmul.f32 %v1793, 1.6666666
    %v1795 = vld [vmem:[#allocation26] sm:$0xf]
    %v1796 = vld [vmem:[#allocation26 + $0x4] sm:$0xf]
    %v1797 = vld [vmem:[#allocation26 + $0x8] sm:$0xf]
    %v1798 = vld [vmem:[#allocation26 + $0xc] sm:$0xf]
    %v1799 = vpack.c.bf16 %v1794, %v1794
    %v1800 = vld [vmem:[%s55] sm:$0x1]
    %v1802 = vperm.slane %v1800, 0
    %v1808 = vunpack.c.l.b16 %v1795
    %v1809 = vunpack.c.l.b16 %v1796
    %v1810 = vunpack.c.l.b16 %v1797
    %v1811 = vunpack.c.l.b16 %v1798
    %v1812 = vpack.c.b16 %v1809, %v1808
    %v1813 = vpack.c.b16 %v1811, %v1810
    %v1817 = vsel %vm432, %v1799, 0
    %1819 = vmatpush.bf16.msra.mxu0 0
    %1820 = vmatpush.bf16.msra.mxu0 0
    %1821 = vmatpush.bf16.msra.mxu0 0
    %1822 = vmatpush.bf16.msra.mxu0 0
    %1823 = vmatpush.bf16.msra.mxu0 0
    %1824 = vmatpush.bf16.msra.mxu0 0
    %1825 = vmatpush.bf16.msra.mxu0 %v1813
    %1826 = vmatpush.bf16.msra.mxu0 %v1812
    %1827 = vmatmul.bf16.gmra.mxu0 %v1817
    %v1828 = vpop.f32.mrf.mxu0
    %v1829 = vadd.f32 %v1802, %v1828
    %v1830 = vpop.f32.mrf.mxu0
    %1831 = vdwg.mxu0
    %v1832 = vxor.u32 %v1829, 2147483648
    %v1833 = vmul.f32 %v1832, 1.442695
    %v1834 = vpow.pop %v1833
    %v1835 = vadd.f32 %v1834, 1.0
    %v1836 = vrcp.pop %v1835
    %v1837 = vmul.f32 %v1835, %v1836
    %v1838 = vsub.f32 1.0, %v1837
    %v1839 = vmul.f32 %v1836, %v1838
    %v1840 = vadd.f32 %v1836, %v1839
    %vm1841 = vweird.f32 %v1835
    %vm1842 = vweird.f32 %v1836
    %vm1843 = vmor %vm1841, %vm1842
    %v1844 = vsel %vm1843, %v1836, %v1840
    %v1845 = vand.u32 2147483647, %v1835
    %vm1846 = vcmp.eq.f32.partialorder %v1845, 8.507059e+37
    %v1847 = vand.u32 %v1835, 2147483648
    %v1848 = vor.u32 1.1754944e-38, %v1847
    %v1849 = vsel %vm1846, %v1848, %v1844
    %v1850 = vmul.f32 1.0, %v1849
    %v1851 = vmul.f32 %v1829, %v1850
    %v1852 = vmul.f32 %v1851, 1.6666666
    %1853 = vst.msk [vmem:[#allocation28] sm:$0xff] %vm580, %v1852
    %1855 = vrot.lane.b32.xlu0 %v1829, 112
    %v1856 = vpop.permute.xlu0 %1855
    %v1858 = vmul.f32 %v1678, %v1856
    %1859 = vst.msk [vmem:[%s59] sm:$0xff] %vm580, %v1858
    %v1860 = vmul.f32 %v1680, %v1856
    %1861 = vst.msk [vmem:[%s59 + $0x8] sm:$0xff] %vm580, %v1860
    %v1862 = vmul.f32 %v1683, %v1856
    %1863 = vst.msk [vmem:[%s59 + $0x10] sm:$0xff] %vm580, %v1862
    // Predicated region
    $region178: #{tpu_custom_call.1} parent=1 // pred_check
      _
    $region179: #{tpu_custom_call.1} parent=1 // pred_check_branch
      %1865 = sbr.rel (0) target = $region181
    $region180: #{tpu_custom_call.1} parent=1 // pred_region
      %1867 = vsyncadd [#allocation4], 0
      %s1869 = sshll.u32 [#allocation28], 4
      %s1870 = int_to_ptr.vmem [resolvable:$true] %s1869
      %s1871 = sshll.u32 %s57, 4
      %s1872 = int_to_ptr.hbm [resolvable:$true] %s1871
      %1874 = dma.vmem_to_hbm [thread:$0]  %s1870, 128, %s1872, [#allocation4]
    $region181: #{tpu_custom_call.1} parent=1 // pred_fallthru
      _
    // Predicated region
    $region182: #{tpu_custom_call.1} parent=1 // pred_check
      _
    $region183: #{tpu_custom_call.1} parent=1 // pred_check_branch
      %1876 = sbr.rel (0) target = $region185
    $region184: #{tpu_custom_call.1} parent=1 // pred_region
      _
    $region185: #{tpu_custom_call.1} parent=1 // pred_fallthru
      _
    // Predicated region
    $region186: #{tpu_custom_call.1} parent=1 // pred_check
      _
    $region187: #{tpu_custom_call.1} parent=1 // pred_check_branch
      %1878 = sbr.rel (0) target = $region189
    $region188: #{tpu_custom_call.1} parent=1 // pred_region
      %1880 = dma.done [#allocation4], 128
    $region189: #{tpu_custom_call.1} parent=1 // pred_fallthru
      _
    // Predicated region
    $region190: #{tpu_custom_call.1} parent=1 // pred_check
      _
    $region191: #{tpu_custom_call.1} parent=1 // pred_check_branch
      %1882 = sbr.rel (0) target = $region193
    $region192: #{tpu_custom_call.1} parent=1 // pred_region
      _
    $region193: #{tpu_custom_call.1} parent=1 // pred_fallthru
      _
    %1883 = vsyncpa [#allocation3], 1
    %1884 = vsyncpa [#allocation6], 1
    %1885 = vsyncpa [#allocation9], 1
    %1886 = vsyncpa [#allocation12], 1
    %1887 = vsyncpa [#allocation15], 1
    %1888 = vsyncpa [#allocation18], 1
    %1889 = vsyncpa [#allocation21], 1
    %1890 = vsyncpa [#allocation24], 1
    %1891 = vsyncpa [#allocation27], 1
    %1892 = vsyncpa [#allocation4], 1

</llo_original>
